<compile_context>
chip_gen: v6e
topology: v6e:2x2x1
jax: 0.10.0
libtpu: 0.0.40
codegen_flags: <defaults>
</compile_context>

<pallas_src>
import jax
import jax.numpy as jnp
from jax.experimental import pallas as pl
from jax.experimental.pallas import tpu as pltpu


def _round_up(x, m):
    return (x + m - 1) // m * m


def _mlp_kernel(grid_ref, pallet_ref,
                w1g_ref, w1p_ref, b1_ref,
                w2_ref, b2_ref,
                w3_ref, b3_ref,
                w4_ref, b4_ref,
                o_ref):
    """Fused 4-layer MLP (3x ReLU) for one batch tile, fully VMEM resident."""
    # Direct int->bf16 cast replaces the wrapper-side .float()/flatten/concat.
    # Exact for small categorical grid values (|v| <= 256).
    xg = grid_ref[...].astype(jnp.bfloat16)     # [TM, Kg]
    xp = pallet_ref[...].astype(jnp.bfloat16)   # [TM, Kp]

    # fc1 as split-K: lane-aligned grid part (K=1024) + tiny pallet part (K=8),
    # both on the bf16 MXU path, accumulated in f32.
    h = jnp.dot(xg, w1g_ref[...], preferred_element_type=jnp.float32)
    h = h + jnp.dot(xp, w1p_ref[...], preferred_element_type=jnp.float32)
    h = jnp.maximum(h + b1_ref[...], 0.0)

    h = jnp.dot(h.astype(jnp.bfloat16), w2_ref[...],
                preferred_element_type=jnp.float32)
    h = jnp.maximum(h + b2_ref[...], 0.0)

    h = jnp.dot(h.astype(jnp.bfloat16), w3_ref[...],
                preferred_element_type=jnp.float32)
    h = jnp.maximum(h + b3_ref[...], 0.0)

    q = jnp.dot(h.astype(jnp.bfloat16), w4_ref[...],
                preferred_element_type=jnp.float32)
    o_ref[...] = (q + b4_ref[...]).astype(o_ref.dtype)


def flatten_grid_model_forward(current_grid, next_pallet_info, params,
                               num_outputs):
    """JAX wrapper reproducing FlattenGridModel.forward (no action-mask path)."""
    w1g, w1p, b1, w2, b2, w3, b3, w4p, b4p = params

    B = current_grid.shape[0]
    grid_flat = current_grid.reshape(B, -1)     # dtype cast happens in-kernel
    if next_pallet_info.ndim == 1:
        next_pallet_info = next_pallet_info[None, :]
    pallet = next_pallet_info

    kg = grid_flat.shape[1]
    kp = pallet.shape[1]
    out_pad = w4p.shape[1]

    # Batch tiling.  No jnp.pad of the inputs: Pallas clips the partial last
    # block.  Tile rows aligned to the grid dtype's native sublane packing
    # (int8 -> 32, bf16 -> 16, f32/int32 -> 8); cap at 512 rows; for large B
    # target >= 2 tiles so the parallel batch axis can shard across v7x's TCs.
    itemsize = jnp.dtype(grid_flat.dtype).itemsize
    row_align = 8 * max(1, 4 // itemsize)
    if B <= 256:
        tm = _round_up(B, row_align)
    else:
        tm = min(512, _round_up(pl.cdiv(B, 2), row_align))
    n_tiles = pl.cdiv(B, tm)
    b_out = _round_up(B, 8)   # allocation only (no copy); sliced back to B

    def const(shape):
        return pl.BlockSpec(shape, lambda i: (0, 0))

    q_padded = pl.pallas_call(
        _mlp_kernel,
        out_shape=jax.ShapeDtypeStruct((b_out, out_pad), jnp.float32),
        grid=(n_tiles,),
        in_specs=[
            pl.BlockSpec((tm, kg), lambda i: (i, 0)),
            pl.BlockSpec((tm, kp), lambda i: (i, 0)),
            const(w1g.shape), const(w1p.shape), const(b1.shape),
            const(w2.shape), const(b2.shape),
            const(w3.shape), const(b3.shape),
            const(w4p.shape), const(b4p.shape),
        ],
        out_specs=pl.BlockSpec((tm, out_pad), lambda i: (i, 0)),
        compiler_params=pltpu.CompilerParams(
            dimension_semantics=("parallel",)),
    )(grid_flat, pallet, w1g, w1p, b1, w2, b2, w3, b3, w4p, b4p)

    # TODO(synk): action-mask branch (masked_fill built from a python list of
    # per-env info dicts) is host-side data-dependent control flow; omitted.
    return q_padded[:B, :num_outputs]


def init_raw_params(key, current_grid_shape, pallet_dim, num_outputs):
    """f32 parameters matching the nn.Linear layers, stored as [in, out]."""
    flatten_size = 1
    for d in current_grid_shape:
        flatten_size *= d
    total_input_size = flatten_size + pallet_dim

    dims = [(total_input_size, 256), (256, 128), (128, 64), (64, num_outputs)]
    raw = []
    for i, (fan_in, fan_out) in enumerate(dims):
        kw, kb = jax.random.split(jax.random.fold_in(key, i))
        bound = 1.0 / (fan_in ** 0.5)
        w = jax.random.uniform(kw, (fan_in, fan_out), jnp.float32, -bound, bound)
        b = jax.random.uniform(kb, (1, fan_out), jnp.float32, -bound, bound)
        raw.append((w, b))
    return raw, flatten_size


def pack_params(raw, flatten_size, num_outputs):
    """Kernel-layout params: fc1 split into grid/pallet row blocks, all matmul
    weights bf16 (f32 accumulation in-kernel), q_head padded to 128 lanes."""
    (w1, b1), (w2, b2), (w3, b3), (w4, b4) = raw
    out_pad = _round_up(max(num_outputs, 1), 128)
    w1g = w1[:flatten_size].astype(jnp.bfloat16)
    w1p = w1[flatten_size:].astype(jnp.bfloat16)
    w4p = (jnp.zeros((w4.shape[0], out_pad), jnp.bfloat16)
           .at[:, :num_outputs].set(w4.astype(jnp.bfloat16)))
    b4p = jnp.zeros((1, out_pad), jnp.float32).at[:, :num_outputs].set(b4)
    return (w1g, w1p, b1,
            w2.astype(jnp.bfloat16), b2,
            w3.astype(jnp.bfloat16), b3,
            w4p, b4p)


def value_function():
    # Placeholder, as in the torch module.
    return jnp.zeros((1,), jnp.float32)


def _reference_bf16(current_grid, next_pallet_info, params, num_outputs):
    """Plain-JAX reference mirroring the kernel's bf16-weight numerics."""
    w1g, w1p, b1, w2, b2, w3, b3, w4p, b4p = params
    B = current_grid.shape[0]
    xg = current_grid.reshape(B, -1).astype(jnp.bfloat16)
    xp = next_pallet_info
    if xp.ndim == 1:
        xp = xp[None, :]
    xp = xp.astype(jnp.bfloat16)
    h = (jnp.dot(xg, w1g, preferred_element_type=jnp.float32)
         + jnp.dot(xp, w1p, preferred_element_type=jnp.float32) + b1)
    h = jnp.maximum(h, 0.0)
    h = jnp.dot(h.astype(jnp.bfloat16), w2,
                preferred_element_type=jnp.float32) + b2
    h = jnp.maximum(h, 0.0)
    h = jnp.dot(h.astype(jnp.bfloat16), w3,
                preferred_element_type=jnp.float32) + b3
    h = jnp.maximum(h, 0.0)
    q = jnp.dot(h.astype(jnp.bfloat16), w4p,
                preferred_element_type=jnp.float32) + b4p
    return q[:, :num_outputs]


def _reference_f32(current_grid, next_pallet_info, raw):
    """Full-f32 reference matching the original PyTorch module semantics."""
    (w1, b1), (w2, b2), (w3, b3), (w4, b4) = raw
    B = current_grid.shape[0]
    xp = next_pallet_info
    if xp.ndim == 1:
        xp = xp[None, :]
    x = jnp.concatenate([current_grid.reshape(B, -1).astype(jnp.float32),
                         xp.astype(jnp.float32)], axis=-1)
    h = jnp.maximum(x @ w1 + b1, 0.0)
    h = jnp.maximum(h @ w2 + b2, 0.0)
    h = jnp.maximum(h @ w3 + b3, 0.0)
    return h @ w4 + b4


if __name__ == "__main__":
    key = jax.random.PRNGKey(0)
    k_grid, k_pallet, k_params = jax.random.split(key, 3)

    # Small synthetic obs space:
    #   current_grid: (B, 4, 16, 16) int8 categorical -> flatten_size = 1024
    #   next_pallet_retrieval_order_and_coordinate: (B, 8) f32
    B = 2
    num_outputs = 16
    grid_shape = (4, 16, 16)
    pallet_dim = 8

    current_grid = jax.random.randint(
        k_grid, (B,) + grid_shape, 0, 3, jnp.int32).astype(jnp.int8)
    next_pallet_info = jax.random.normal(k_pallet, (B, pallet_dim), jnp.float32)

    raw, flatten_size = init_raw_params(
        k_params, grid_shape, pallet_dim, num_outputs)
    params = pack_params(raw, flatten_size, num_outputs)

    q_values = flatten_grid_model_forward(
        current_grid, next_pallet_info, params, num_outputs)
    q_values = jax.block_until_ready(q_values)
    assert q_values.shape == (B, num_outputs)

    # 1) Plumbing check: reference with identical (bf16-weight) numerics.
    q_bf16 = _reference_bf16(current_grid, next_pallet_info, params, num_outputs)
    assert jnp.allclose(q_values, q_bf16, atol=1e-2, rtol=1e-2), (
        float(jnp.max(jnp.abs(q_values - q_bf16))))

    # 2) Fidelity check: full-f32 PyTorch-equivalent reference, looser tol
    #    (covers bf16 weight quantization across all four layers).
    q_f32 = _reference_f32(current_grid, next_pallet_info, raw)
    assert jnp.allclose(q_values, q_f32, atol=5e-2, rtol=5e-2), (
        float(jnp.max(jnp.abs(q_values - q_f32))))

    print("KERNEL_OK")
</pallas_src>

<mosaic_0001>
module attributes {stable_mosaic.version = 11 : i64} {
  func.func @_mlp_kernel(%arg0: i32, %arg1: memref<32x1024xi8, #tpu.memory_space<vmem>>, %arg2: memref<32x8xf32, #tpu.memory_space<vmem>>, %arg3: memref<1024x256xbf16, #tpu.memory_space<vmem>>, %arg4: memref<8x256xbf16, #tpu.memory_space<vmem>>, %arg5: memref<1x256xf32, #tpu.memory_space<vmem>>, %arg6: memref<256x128xbf16, #tpu.memory_space<vmem>>, %arg7: memref<1x128xf32, #tpu.memory_space<vmem>>, %arg8: memref<128x64xbf16, #tpu.memory_space<vmem>>, %arg9: memref<1x64xf32, #tpu.memory_space<vmem>>, %arg10: memref<64x128xbf16, #tpu.memory_space<vmem>>, %arg11: memref<1x128xf32, #tpu.memory_space<vmem>>, %arg12: memref<32x128xf32, #tpu.memory_space<vmem>>) attributes {dimension_semantics = [#tpu.dimension_semantics<parallel>], iteration_bounds = array<i64: 1>, scalar_prefetch = 0 : i64, scratch_operands = 0 : i64, tpu.core_type = #tpu.core_type<tc>, window_params = [{transform_indices = @transform_0, window_bounds = array<i64: 32, 1024>}, {transform_indices = @transform_1, window_bounds = array<i64: 32, 8>}, {pipeline_mode = #tpu.pipeline_mode<synchronous>, transform_indices = @transform_2, window_bounds = array<i64: 1024, 256>}, {pipeline_mode = #tpu.pipeline_mode<synchronous>, transform_indices = @transform_3, window_bounds = array<i64: 8, 256>}, {pipeline_mode = #tpu.pipeline_mode<synchronous>, transform_indices = @transform_4, window_bounds = array<i64: 1, 256>}, {pipeline_mode = #tpu.pipeline_mode<synchronous>, transform_indices = @transform_5, window_bounds = array<i64: 256, 128>}, {pipeline_mode = #tpu.pipeline_mode<synchronous>, transform_indices = @transform_6, window_bounds = array<i64: 1, 128>}, {pipeline_mode = #tpu.pipeline_mode<synchronous>, transform_indices = @transform_7, window_bounds = array<i64: 128, 64>}, {pipeline_mode = #tpu.pipeline_mode<synchronous>, transform_indices = @transform_8, window_bounds = array<i64: 1, 64>}, {pipeline_mode = #tpu.pipeline_mode<synchronous>, transform_indices = @transform_9, window_bounds = array<i64: 64, 128>}, {pipeline_mode = #tpu.pipeline_mode<synchronous>, transform_indices = @transform_10, window_bounds = array<i64: 1, 128>}, {transform_indices = @transform_11, window_bounds = array<i64: 32, 128>}]} {
    %c0 = arith.constant 0 : index
    %c0_0 = arith.constant 0 : index
    %0 = vector.load %arg1[%c0, %c0_0] : memref<32x1024xi8, #tpu.memory_space<vmem>>, vector<32x1024xi8>
    %1 = arith.sitofp %0 : vector<32x1024xi8> to vector<32x1024xbf16>
    %c0_1 = arith.constant 0 : index
    %c0_2 = arith.constant 0 : index
    %2 = vector.load %arg2[%c0_1, %c0_2] : memref<32x8xf32, #tpu.memory_space<vmem>>, vector<32x8xf32>
    %3 = arith.truncf %2 : vector<32x8xf32> to vector<32x8xbf16>
    %c0_3 = arith.constant 0 : index
    %c0_4 = arith.constant 0 : index
    %4 = vector.load %arg3[%c0_3, %c0_4] : memref<1024x256xbf16, #tpu.memory_space<vmem>>, vector<1024x256xbf16>
    %cst = arith.constant dense<0.000000e+00> : vector<32x256xf32>
    %5 = tpu.matmul %1, %4, %cst {dimension_numbers = #tpu.dot_dimension_numbers<[1], [0], [0], [1], [0, 0, 1, 1], [], []>} : vector<32x1024xbf16>, vector<1024x256xbf16>, vector<32x256xf32> -> vector<32x256xf32>
    %c0_5 = arith.constant 0 : index
    %c0_6 = arith.constant 0 : index
    %6 = vector.load %arg4[%c0_5, %c0_6] : memref<8x256xbf16, #tpu.memory_space<vmem>>, vector<8x256xbf16>
    %cst_7 = arith.constant dense<0.000000e+00> : vector<32x256xf32>
    %7 = tpu.matmul %3, %6, %cst_7 {dimension_numbers = #tpu.dot_dimension_numbers<[1], [0], [0], [1], [0, 0, 1, 1], [], []>} : vector<32x8xbf16>, vector<8x256xbf16>, vector<32x256xf32> -> vector<32x256xf32>
    %8 = arith.addf %5, %7 : vector<32x256xf32>
    %c0_8 = arith.constant 0 : index
    %c0_9 = arith.constant 0 : index
    %9 = vector.load %arg5[%c0_8, %c0_9] : memref<1x256xf32, #tpu.memory_space<vmem>>, vector<1x256xf32>
    %10 = vector.broadcast %9 : vector<1x256xf32> to vector<32x256xf32>
    %11 = arith.addf %8, %10 : vector<32x256xf32>
    %cst_10 = arith.constant 0.000000e+00 : f32
    %12 = vector.broadcast %cst_10 : f32 to vector<32x256xf32>
    %13 = arith.maximumf %11, %12 : vector<32x256xf32>
    %14 = arith.truncf %13 : vector<32x256xf32> to vector<32x256xbf16>
    %c0_11 = arith.constant 0 : index
    %c0_12 = arith.constant 0 : index
    %15 = vector.load %arg6[%c0_11, %c0_12] : memref<256x128xbf16, #tpu.memory_space<vmem>>, vector<256x128xbf16>
    %cst_13 = arith.constant dense<0.000000e+00> : vector<32x128xf32>
    %16 = tpu.matmul %14, %15, %cst_13 {dimension_numbers = #tpu.dot_dimension_numbers<[1], [0], [0], [1], [0, 0, 1, 1], [], []>} : vector<32x256xbf16>, vector<256x128xbf16>, vector<32x128xf32> -> vector<32x128xf32>
    %c0_14 = arith.constant 0 : index
    %c0_15 = arith.constant 0 : index
    %17 = vector.load %arg7[%c0_14, %c0_15] : memref<1x128xf32, #tpu.memory_space<vmem>>, vector<1x128xf32>
    %18 = vector.broadcast %17 : vector<1x128xf32> to vector<32x128xf32>
    %19 = arith.addf %16, %18 : vector<32x128xf32>
    %cst_16 = arith.constant 0.000000e+00 : f32
    %20 = vector.broadcast %cst_16 : f32 to vector<32x128xf32>
    %21 = arith.maximumf %19, %20 : vector<32x128xf32>
    %22 = arith.truncf %21 : vector<32x128xf32> to vector<32x128xbf16>
    %c0_17 = arith.constant 0 : index
    %c0_18 = arith.constant 0 : index
    %23 = vector.load %arg8[%c0_17, %c0_18] : memref<128x64xbf16, #tpu.memory_space<vmem>>, vector<128x64xbf16>
    %cst_19 = arith.constant dense<0.000000e+00> : vector<32x64xf32>
    %24 = tpu.matmul %22, %23, %cst_19 {dimension_numbers = #tpu.dot_dimension_numbers<[1], [0], [0], [1], [0, 0, 1, 1], [], []>} : vector<32x128xbf16>, vector<128x64xbf16>, vector<32x64xf32> -> vector<32x64xf32>
    %c0_20 = arith.constant 0 : index
    %c0_21 = arith.constant 0 : index
    %25 = vector.load %arg9[%c0_20, %c0_21] : memref<1x64xf32, #tpu.memory_space<vmem>>, vector<1x64xf32>
    %26 = vector.broadcast %25 : vector<1x64xf32> to vector<32x64xf32>
    %27 = arith.addf %24, %26 : vector<32x64xf32>
    %cst_22 = arith.constant 0.000000e+00 : f32
    %28 = vector.broadcast %cst_22 : f32 to vector<32x64xf32>
    %29 = arith.maximumf %27, %28 : vector<32x64xf32>
    %30 = arith.truncf %29 : vector<32x64xf32> to vector<32x64xbf16>
    %c0_23 = arith.constant 0 : index
    %c0_24 = arith.constant 0 : index
    %31 = vector.load %arg10[%c0_23, %c0_24] : memref<64x128xbf16, #tpu.memory_space<vmem>>, vector<64x128xbf16>
    %cst_25 = arith.constant dense<0.000000e+00> : vector<32x128xf32>
    %32 = tpu.matmul %30, %31, %cst_25 {dimension_numbers = #tpu.dot_dimension_numbers<[1], [0], [0], [1], [0, 0, 1, 1], [], []>} : vector<32x64xbf16>, vector<64x128xbf16>, vector<32x128xf32> -> vector<32x128xf32>
    %c0_26 = arith.constant 0 : index
    %c0_27 = arith.constant 0 : index
    %33 = vector.load %arg11[%c0_26, %c0_27] : memref<1x128xf32, #tpu.memory_space<vmem>>, vector<1x128xf32>
    %34 = vector.broadcast %33 : vector<1x128xf32> to vector<32x128xf32>
    %35 = arith.addf %32, %34 : vector<32x128xf32>
    %c0_28 = arith.constant 0 : index
    %c0_29 = arith.constant 0 : index
    %36 = vector.load %arg12[%c0_28, %c0_29] : memref<32x128xf32, #tpu.memory_space<vmem>>, vector<32x128xf32>
    tpu.vector_store %arg12[%c0_28, %c0_29], %35 {strides = array<i32>} : memref<32x128xf32, #tpu.memory_space<vmem>>, vector<32x128xf32>,
    return
  }
  func.func @transform_0(%arg0: i32) -> (i32, i32) {
    %c0_i32 = arith.constant 0 : i32
    %c0_i32_0 = arith.constant 0 : i32
    return %arg0, %c0_i32 : i32, i32
  }
  func.func @transform_1(%arg0: i32) -> (i32, i32) {
    %c0_i32 = arith.constant 0 : i32
    %c0_i32_0 = arith.constant 0 : i32
    return %arg0, %c0_i32 : i32, i32
  }
  func.func @transform_2(%arg0: i32) -> (i32, i32) {
    %c0_i32 = arith.constant 0 : i32
    %c0_i32_0 = arith.constant 0 : i32
    %c0_i32_1 = arith.constant 0 : i32
    return %c0_i32, %c0_i32_0 : i32, i32
  }
  func.func @transform_3(%arg0: i32) -> (i32, i32) {
    %c0_i32 = arith.constant 0 : i32
    %c0_i32_0 = arith.constant 0 : i32
    %c0_i32_1 = arith.constant 0 : i32
    return %c0_i32, %c0_i32_0 : i32, i32
  }
  func.func @transform_4(%arg0: i32) -> (i32, i32) {
    %c0_i32 = arith.constant 0 : i32
    %c0_i32_0 = arith.constant 0 : i32
    %c0_i32_1 = arith.constant 0 : i32
    return %c0_i32, %c0_i32_0 : i32, i32
  }
  func.func @transform_5(%arg0: i32) -> (i32, i32) {
    %c0_i32 = arith.constant 0 : i32
    %c0_i32_0 = arith.constant 0 : i32
    %c0_i32_1 = arith.constant 0 : i32
    return %c0_i32, %c0_i32_0 : i32, i32
  }
  func.func @transform_6(%arg0: i32) -> (i32, i32) {
    %c0_i32 = arith.constant 0 : i32
    %c0_i32_0 = arith.constant 0 : i32
    %c0_i32_1 = arith.constant 0 : i32
    return %c0_i32, %c0_i32_0 : i32, i32
  }
  func.func @transform_7(%arg0: i32) -> (i32, i32) {
    %c0_i32 = arith.constant 0 : i32
    %c0_i32_0 = arith.constant 0 : i32
    %c0_i32_1 = arith.constant 0 : i32
    return %c0_i32, %c0_i32_0 : i32, i32
  }
  func.func @transform_8(%arg0: i32) -> (i32, i32) {
    %c0_i32 = arith.constant 0 : i32
    %c0_i32_0 = arith.constant 0 : i32
    %c0_i32_1 = arith.constant 0 : i32
    return %c0_i32, %c0_i32_0 : i32, i32
  }
  func.func @transform_9(%arg0: i32) -> (i32, i32) {
    %c0_i32 = arith.constant 0 : i32
    %c0_i32_0 = arith.constant 0 : i32
    %c0_i32_1 = arith.constant 0 : i32
    return %c0_i32, %c0_i32_0 : i32, i32
  }
  func.func @transform_10(%arg0: i32) -> (i32, i32) {
    %c0_i32 = arith.constant 0 : i32
    %c0_i32_0 = arith.constant 0 : i32
    %c0_i32_1 = arith.constant 0 : i32
    return %c0_i32, %c0_i32_0 : i32, i32
  }
  func.func @transform_11(%arg0: i32) -> (i32, i32) {
    %c0_i32 = arith.constant 0 : i32
    %c0_i32_0 = arith.constant 0 : i32
    return %arg0, %c0_i32 : i32, i32
  }
}

</mosaic_0001>

<llo_original>
// kernel: tpu_custom_call.1
$region0: #{tpu_custom_call.1}
  #allocation0 [shape = 'u32[]', space=smem, size = 0x4, offset = 0x4, fixed_abs, tag = 'smem constant byte address 0x4 - core index']
  #allocation1 [shape = 'u32[144,128]{1,0:T(1,128)}', space=vmem, size = 0x12000, scoped, tag = 'internal scratch']
  %s0 = inlined_call_operand.vmem [shape: s8[2,1024], index: 0, kind: input, shape index: {}]
  %s1 = inlined_call_operand.vmem [shape: f32[2,8], index: 1, kind: input, shape index: {}]
  %s2 = inlined_call_operand.hbm [shape: bf16[1024,256], index: 2, kind: input, shape index: {}]
  %s3 = inlined_call_operand.vmem [shape: bf16[8,256], index: 3, kind: input, shape index: {}]
  %s4 = inlined_call_operand.vmem [shape: f32[1,256], index: 4, kind: input, shape index: {}]
  %s5 = inlined_call_operand.hbm [shape: bf16[256,128], index: 5, kind: input, shape index: {}]
  %s6 = inlined_call_operand.vmem [shape: f32[1,128], index: 6, kind: input, shape index: {}]
  %s7 = inlined_call_operand.vmem [shape: bf16[128,64], index: 7, kind: input, shape index: {}]
  %s8 = inlined_call_operand.vmem [shape: f32[1,64], index: 8, kind: input, shape index: {}]
  %s9 = inlined_call_operand.vmem [shape: bf16[64,128], index: 9, kind: input, shape index: {}]
  %s10 = inlined_call_operand.vmem [shape: f32[1,128], index: 10, kind: input, shape index: {}]
  %s11 = inlined_call_operand.hbm [shape: f32[8,128], index: 11, kind: output, shape index: {}]
  %s12 = sld [smem:[#allocation0]]
  $region62: #{tpu_custom_call.1} parent=0
    _
  %s14 = ssub.s32 1, %s12
  %s15 = scalar_select 0, %s14, %s12
  $region1: #{tpu_custom_call.1} parent=0
    #allocation2 [shape = 'u8[524288]{0}', space=vmem, size = 0x80000, scoped, tag = 'input window, operand 2, single buffered']
    #allocation3 [shape = 's32[1]{0}', space=sflag, size = 0x4, scoped, tag = 'scoped memory for tpu_custom_call.1']
    #allocation4 [shape = 's32[1]{0}', space=sflag, size = 0x4, scoped, tag = 'scoped memory for tpu_custom_call.1']
    #allocation5 [shape = 'u8[65536]{0}', space=vmem, size = 0x10000, scoped, tag = 'input window, operand 5, single buffered']
    #allocation6 [shape = 's32[1]{0}', space=sflag, size = 0x4, scoped, tag = 'scoped memory for tpu_custom_call.1']
    #allocation7 [shape = 'u8[16384]{0}', space=vmem, size = 0x4000, scoped, tag = 'output window, operand 0, single buffered']
    %16 = vsyncpa [#allocation3], 0
    %17 = vsyncpa [#allocation6], 0
    %18 = vsyncpa [#allocation4], 0
    // Predicated region
    $region2: #{tpu_custom_call.1} parent=1 // pred_check
      _
    $region3: #{tpu_custom_call.1} parent=1 // pred_check_branch
      %20 = sbr.rel (0) target = $region5
    $region4: #{tpu_custom_call.1} parent=1 // pred_region
      _
    $region5: #{tpu_custom_call.1} parent=1 // pred_fallthru
      _
    // Predicated region
    $region6: #{tpu_custom_call.1} parent=1 // pred_check
      _
    $region7: #{tpu_custom_call.1} parent=1 // pred_check_branch
      %22 = sbr.rel (0) target = $region9
    $region8: #{tpu_custom_call.1} parent=1 // pred_region
      _
    $region9: #{tpu_custom_call.1} parent=1 // pred_fallthru
      _
    // Predicated region
    $region10: #{tpu_custom_call.1} parent=1 // pred_check
      _
    $region11: #{tpu_custom_call.1} parent=1 // pred_check_branch
      %24 = sbr.rel (0) target = $region13
    $region12: #{tpu_custom_call.1} parent=1 // pred_region
      %s26 = ssub.s32 16384, 16384
      %27 = vsyncadd [#allocation3], %s26
      %s28 = sshll.u32 [#allocation2], 4
      %s29 = int_to_ptr.vmem [resolvable:$true] %s28
      %34 = dma.hbm_to_vmem [thread:$0]  %s2, 16384, %s29, [#allocation3], 128, 128, 8
    $region13: #{tpu_custom_call.1} parent=1 // pred_fallthru
      _
    // Predicated region
    $region14: #{tpu_custom_call.1} parent=1 // pred_check
      _
    $region15: #{tpu_custom_call.1} parent=1 // pred_check_branch
      %36 = sbr.rel (0) target = $region17
    $region16: #{tpu_custom_call.1} parent=1 // pred_region
      _
    $region17: #{tpu_custom_call.1} parent=1 // pred_fallthru
      _
    // Predicated region
    $region18: #{tpu_custom_call.1} parent=1 // pred_check
      _
    $region19: #{tpu_custom_call.1} parent=1 // pred_check_branch
      %38 = sbr.rel (0) target = $region21
    $region20: #{tpu_custom_call.1} parent=1 // pred_region
      _
    $region21: #{tpu_custom_call.1} parent=1 // pred_fallthru
      _
    // Predicated region
    $region22: #{tpu_custom_call.1} parent=1 // pred_check
      _
    $region23: #{tpu_custom_call.1} parent=1 // pred_check_branch
      %40 = sbr.rel (0) target = $region25
    $region24: #{tpu_custom_call.1} parent=1 // pred_region
      %s42 = ssub.s32 2048, 2048
      %43 = vsyncadd [#allocation6], %s42
      %s44 = sshll.u32 [#allocation5], 4
      %s45 = int_to_ptr.vmem [resolvable:$true] %s44
      %50 = dma.hbm_to_vmem [thread:$0]  %s5, 2048, %s45, [#allocation6], 64, 64, 4
    $region25: #{tpu_custom_call.1} parent=1 // pred_fallthru
      _
    // Predicated region
    $region26: #{tpu_custom_call.1} parent=1 // pred_check
      _
    $region27: #{tpu_custom_call.1} parent=1 // pred_check_branch
      %52 = sbr.rel (0) target = $region29
    $region28: #{tpu_custom_call.1} parent=1 // pred_region
      _
    $region29: #{tpu_custom_call.1} parent=1 // pred_fallthru
      _
    // Predicated region
    $region30: #{tpu_custom_call.1} parent=1 // pred_check
      _
    $region31: #{tpu_custom_call.1} parent=1 // pred_check_branch
      %54 = sbr.rel (0) target = $region33
    $region32: #{tpu_custom_call.1} parent=1 // pred_region
      _
    $region33: #{tpu_custom_call.1} parent=1 // pred_fallthru
      _
    // Predicated region
    $region34: #{tpu_custom_call.1} parent=1 // pred_check
      _
    $region35: #{tpu_custom_call.1} parent=1 // pred_check_branch
      %56 = sbr.rel (0) target = $region37
    $region36: #{tpu_custom_call.1} parent=1 // pred_region
      _
    $region37: #{tpu_custom_call.1} parent=1 // pred_fallthru
      _
    // Predicated region
    $region38: #{tpu_custom_call.1} parent=1 // pred_check
      _
    $region39: #{tpu_custom_call.1} parent=1 // pred_check_branch
      %58 = sbr.rel (0) target = $region41
    $region40: #{tpu_custom_call.1} parent=1 // pred_region
      _
    $region41: #{tpu_custom_call.1} parent=1 // pred_fallthru
      _
    // Predicated region
    $region42: #{tpu_custom_call.1} parent=1 // pred_check
      _
    $region43: #{tpu_custom_call.1} parent=1 // pred_check_branch
      %60 = sbr.rel (0) target = $region45
    $region44: #{tpu_custom_call.1} parent=1 // pred_region
      _
    $region45: #{tpu_custom_call.1} parent=1 // pred_fallthru
      _
    // Predicated region
    $region46: #{tpu_custom_call.1} parent=1 // pred_check
      _
    $region47: #{tpu_custom_call.1} parent=1 // pred_check_branch
      %62 = sbr.rel (0) target = $region49
    $region48: #{tpu_custom_call.1} parent=1 // pred_region
      %63 = dma.done [#allocation3], 16384
    $region49: #{tpu_custom_call.1} parent=1 // pred_fallthru
      _
    // Predicated region
    $region50: #{tpu_custom_call.1} parent=1 // pred_check
      _
    $region51: #{tpu_custom_call.1} parent=1 // pred_check_branch
      %65 = sbr.rel (0) target = $region53
    $region52: #{tpu_custom_call.1} parent=1 // pred_region
      %66 = dma.done [#allocation6], 2048
    $region53: #{tpu_custom_call.1} parent=1 // pred_fallthru
      _
    %v68 = vld [vmem:[%s0] sm:$0xff]
    %v69 = vld [vmem:[%s0 + $0x8] sm:$0xff]
    %v70 = vld [vmem:[%s0 + $0x10] sm:$0xff]
    %v71 = vld [vmem:[%s0 + $0x18] sm:$0xff]
    %v72 = vld [vmem:[%s0 + $0x20] sm:$0xff]
    %v73 = vld [vmem:[%s0 + $0x28] sm:$0xff]
    %v74 = vld [vmem:[%s0 + $0x30] sm:$0xff]
    %v75 = vld [vmem:[%s0 + $0x38] sm:$0xff]
    %v76 = vcombine.low %v68, %v69
    %v77 = vcombine.high %v68, %v69
    %v79 = vunpack.c.l.s4 1935823168
    %v80 = vunpack.c.0.s8 %v79
    %v81 = vlaneseq
    %v82 = vshrl.u32 %v81, 7
    %v83 = vsub.s32 %v80, %v82
    %v84 = vrot.slane %v76, %v83
    %v86 = vunpack.c.l.s4 1935823168
    %v87 = vunpack.c.0.s8 %v86
    %v88 = vlaneseq
    %v89 = vshrl.u32 %v88, 7
    %v90 = vsub.s32 %v87, %v89
    %v91 = vrot.slane %v77, %v90
    %v92 = vcombine.low %v70, %v71
    %v93 = vcombine.high %v70, %v71
    %v95 = vunpack.c.l.s4 1935823168
    %v96 = vunpack.c.0.s8 %v95
    %v97 = vlaneseq
    %v98 = vshrl.u32 %v97, 7
    %v99 = vsub.s32 %v96, %v98
    %v100 = vrot.slane %v92, %v99
    %v102 = vunpack.c.l.s4 1935823168
    %v103 = vunpack.c.0.s8 %v102
    %v104 = vlaneseq
    %v105 = vshrl.u32 %v104, 7
    %v106 = vsub.s32 %v103, %v105
    %v107 = vrot.slane %v93, %v106
    %v108 = vcombine.low %v72, %v73
    %v109 = vcombine.high %v72, %v73
    %v111 = vunpack.c.l.s4 1935823168
    %v112 = vunpack.c.0.s8 %v111
    %v113 = vlaneseq
    %v114 = vshrl.u32 %v113, 7
    %v115 = vsub.s32 %v112, %v114
    %v116 = vrot.slane %v108, %v115
    %v118 = vunpack.c.l.s4 1935823168
    %v119 = vunpack.c.0.s8 %v118
    %v120 = vlaneseq
    %v121 = vshrl.u32 %v120, 7
    %v122 = vsub.s32 %v119, %v121
    %v123 = vrot.slane %v109, %v122
    %v124 = vcombine.low %v74, %v75
    %v125 = vcombine.high %v74, %v75
    %v127 = vunpack.c.l.s4 1935823168
    %v128 = vunpack.c.0.s8 %v127
    %v129 = vlaneseq
    %v130 = vshrl.u32 %v129, 7
    %v131 = vsub.s32 %v128, %v130
    %v132 = vrot.slane %v124, %v131
    %v134 = vunpack.c.l.s4 1935823168
    %v135 = vunpack.c.0.s8 %v134
    %v136 = vlaneseq
    %v137 = vshrl.u32 %v136, 7
    %v138 = vsub.s32 %v135, %v137
    %v139 = vrot.slane %v125, %v138
    %v140 = vunpack.c.l.s8.bf16 %v84
    %v141 = vunpack.c.h.s8.bf16 %v84
    %v142 = vunpack.c.l.s8.bf16 %v91
    %v143 = vunpack.c.h.s8.bf16 %v91
    %v144 = vunpack.c.l.s8.bf16 %v100
    %v145 = vunpack.c.h.s8.bf16 %v100
    %v146 = vunpack.c.l.s8.bf16 %v107
    %v147 = vunpack.c.h.s8.bf16 %v107
    %v148 = vunpack.c.l.s8.bf16 %v116
    %v149 = vunpack.c.h.s8.bf16 %v116
    %v150 = vunpack.c.l.s8.bf16 %v123
    %v151 = vunpack.c.h.s8.bf16 %v123
    %v152 = vunpack.c.l.s8.bf16 %v132
    %v153 = vunpack.c.h.s8.bf16 %v132
    %v154 = vunpack.c.l.s8.bf16 %v139
    %v155 = vunpack.c.h.s8.bf16 %v139
    %v156 = vld [vmem:[%s1] sm:$0xff]
    %v157 = vld [vmem:[%s1 + $0x8] sm:$0xff]
    %v158 = vld [vmem:[%s1 + $0x10] sm:$0xff]
    %v159 = vld [vmem:[%s1 + $0x18] sm:$0xff]
    %v160 = vpack.c.bf16 %v157, %v156
    %v161 = vpack.c.bf16 %v159, %v158
    %v162 = vld [vmem:[#allocation2] sm:$0xff]
    %v163 = vld [vmem:[#allocation2 + $0x8] sm:$0xff]
    %v164 = vld [vmem:[#allocation2 + $0x10] sm:$0xff]
    %v165 = vld [vmem:[#allocation2 + $0x18] sm:$0xff]
    %v166 = vld [vmem:[#allocation2 + $0x20] sm:$0xff]
    %v167 = vld [vmem:[#allocation2 + $0x28] sm:$0xff]
    %v168 = vld [vmem:[#allocation2 + $0x30] sm:$0xff]
    %v169 = vld [vmem:[#allocation2 + $0x38] sm:$0xff]
    %v170 = vld [vmem:[#allocation2 + $0x40] sm:$0xff]
    %v171 = vld [vmem:[#allocation2 + $0x48] sm:$0xff]
    %v172 = vld [vmem:[#allocation2 + $0x50] sm:$0xff]
    %v173 = vld [vmem:[#allocation2 + $0x58] sm:$0xff]
    %v174 = vld [vmem:[#allocation2 + $0x60] sm:$0xff]
    %v175 = vld [vmem:[#allocation2 + $0x68] sm:$0xff]
    %v176 = vld [vmem:[#allocation2 + $0x70] sm:$0xff]
    %v177 = vld [vmem:[#allocation2 + $0x78] sm:$0xff]
    %v178 = vld [vmem:[#allocation2 + $0x80] sm:$0xff]
    %v179 = vld [vmem:[#allocation2 + $0x88] sm:$0xff]
    %v180 = vld [vmem:[#allocation2 + $0x90] sm:$0xff]
    %v181 = vld [vmem:[#allocation2 + $0x98] sm:$0xff]
    %v182 = vld [vmem:[#allocation2 + $0xa0] sm:$0xff]
    %v183 = vld [vmem:[#allocation2 + $0xa8] sm:$0xff]
    %v184 = vld [vmem:[#allocation2 + $0xb0] sm:$0xff]
    %v185 = vld [vmem:[#allocation2 + $0xb8] sm:$0xff]
    %v186 = vld [vmem:[#allocation2 + $0xc0] sm:$0xff]
    %v187 = vld [vmem:[#allocation2 + $0xc8] sm:$0xff]
    %v188 = vld [vmem:[#allocation2 + $0xd0] sm:$0xff]
    %v189 = vld [vmem:[#allocation2 + $0xd8] sm:$0xff]
    %v190 = vld [vmem:[#allocation2 + $0xe0] sm:$0xff]
    %v191 = vld [vmem:[#allocation2 + $0xe8] sm:$0xff]
    %v192 = vld [vmem:[#allocation2 + $0xf0] sm:$0xff]
    %v193 = vld [vmem:[#allocation2 + $0xf8] sm:$0xff]
    %v194 = vld [vmem:[#allocation2 + $0x100] sm:$0xff]
    %v195 = vld [vmem:[#allocation2 + $0x108] sm:$0xff]
    %v196 = vld [vmem:[#allocation2 + $0x110] sm:$0xff]
    %v197 = vld [vmem:[#allocation2 + $0x118] sm:$0xff]
    %v198 = vld [vmem:[#allocation2 + $0x120] sm:$0xff]
    %v199 = vld [vmem:[#allocation2 + $0x128] sm:$0xff]
    %v200 = vld [vmem:[#allocation2 + $0x130] sm:$0xff]
    %v201 = vld [vmem:[#allocation2 + $0x138] sm:$0xff]
    %v202 = vld [vmem:[#allocation2 + $0x140] sm:$0xff]
    %v203 = vld [vmem:[#allocation2 + $0x148] sm:$0xff]
    %v204 = vld [vmem:[#allocation2 + $0x150] sm:$0xff]
    %v205 = vld [vmem:[#allocation2 + $0x158] sm:$0xff]
    %v206 = vld [vmem:[#allocation2 + $0x160] sm:$0xff]
    %v207 = vld [vmem:[#allocation2 + $0x168] sm:$0xff]
    %v208 = vld [vmem:[#allocation2 + $0x170] sm:$0xff]
    %v209 = vld [vmem:[#allocation2 + $0x178] sm:$0xff]
    %v210 = vld [vmem:[#allocation2 + $0x180] sm:$0xff]
    %v211 = vld [vmem:[#allocation2 + $0x188] sm:$0xff]
    %v212 = vld [vmem:[#allocation2 + $0x190] sm:$0xff]
    %v213 = vld [vmem:[#allocation2 + $0x198] sm:$0xff]
    %v214 = vld [vmem:[#allocation2 + $0x1a0] sm:$0xff]
    %v215 = vld [vmem:[#allocation2 + $0x1a8] sm:$0xff]
    %v216 = vld [vmem:[#allocation2 + $0x1b0] sm:$0xff]
    %v217 = vld [vmem:[#allocation2 + $0x1b8] sm:$0xff]
    %v218 = vld [vmem:[#allocation2 + $0x1c0] sm:$0xff]
    %v219 = vld [vmem:[#allocation2 + $0x1c8] sm:$0xff]
    %v220 = vld [vmem:[#allocation2 + $0x1d0] sm:$0xff]
    %v221 = vld [vmem:[#allocation2 + $0x1d8] sm:$0xff]
    %v222 = vld [vmem:[#allocation2 + $0x1e0] sm:$0xff]
    %v223 = vld [vmem:[#allocation2 + $0x1e8] sm:$0xff]
    %v224 = vld [vmem:[#allocation2 + $0x1f0] sm:$0xff]
    %v225 = vld [vmem:[#allocation2 + $0x1f8] sm:$0xff]
    %v226 = vld [vmem:[#allocation2 + $0x200] sm:$0xff]
    %v227 = vld [vmem:[#allocation2 + $0x208] sm:$0xff]
    %v228 = vld [vmem:[#allocation2 + $0x210] sm:$0xff]
    %v229 = vld [vmem:[#allocation2 + $0x218] sm:$0xff]
    %v230 = vld [vmem:[#allocation2 + $0x220] sm:$0xff]
    %v231 = vld [vmem:[#allocation2 + $0x228] sm:$0xff]
    %v232 = vld [vmem:[#allocation2 + $0x230] sm:$0xff]
    %v233 = vld [vmem:[#allocation2 + $0x238] sm:$0xff]
    %v234 = vld [vmem:[#allocation2 + $0x240] sm:$0xff]
    %v235 = vld [vmem:[#allocation2 + $0x248] sm:$0xff]
    %v236 = vld [vmem:[#allocation2 + $0x250] sm:$0xff]
    %v237 = vld [vmem:[#allocation2 + $0x258] sm:$0xff]
    %v238 = vld [vmem:[#allocation2 + $0x260] sm:$0xff]
    %v239 = vld [vmem:[#allocation2 + $0x268] sm:$0xff]
    %v240 = vld [vmem:[#allocation2 + $0x270] sm:$0xff]
    %v241 = vld [vmem:[#allocation2 + $0x278] sm:$0xff]
    %v242 = vld [vmem:[#allocation2 + $0x280] sm:$0xff]
    %v243 = vld [vmem:[#allocation2 + $0x288] sm:$0xff]
    %v244 = vld [vmem:[#allocation2 + $0x290] sm:$0xff]
    %v245 = vld [vmem:[#allocation2 + $0x298] sm:$0xff]
    %v246 = vld [vmem:[#allocation2 + $0x2a0] sm:$0xff]
    %v247 = vld [vmem:[#allocation2 + $0x2a8] sm:$0xff]
    %v248 = vld [vmem:[#allocation2 + $0x2b0] sm:$0xff]
    %v249 = vld [vmem:[#allocation2 + $0x2b8] sm:$0xff]
    %v250 = vld [vmem:[#allocation2 + $0x2c0] sm:$0xff]
    %v251 = vld [vmem:[#allocation2 + $0x2c8] sm:$0xff]
    %v252 = vld [vmem:[#allocation2 + $0x2d0] sm:$0xff]
    %v253 = vld [vmem:[#allocation2 + $0x2d8] sm:$0xff]
    %v254 = vld [vmem:[#allocation2 + $0x2e0] sm:$0xff]
    %v255 = vld [vmem:[#allocation2 + $0x2e8] sm:$0xff]
    %v256 = vld [vmem:[#allocation2 + $0x2f0] sm:$0xff]
    %v257 = vld [vmem:[#allocation2 + $0x2f8] sm:$0xff]
    %v258 = vld [vmem:[#allocation2 + $0x300] sm:$0xff]
    %v259 = vld [vmem:[#allocation2 + $0x308] sm:$0xff]
    %v260 = vld [vmem:[#allocation2 + $0x310] sm:$0xff]
    %v261 = vld [vmem:[#allocation2 + $0x318] sm:$0xff]
    %v262 = vld [vmem:[#allocation2 + $0x320] sm:$0xff]
    %v263 = vld [vmem:[#allocation2 + $0x328] sm:$0xff]
    %v264 = vld [vmem:[#allocation2 + $0x330] sm:$0xff]
    %v265 = vld [vmem:[#allocation2 + $0x338] sm:$0xff]
    %v266 = vld [vmem:[#allocation2 + $0x340] sm:$0xff]
    %v267 = vld [vmem:[#allocation2 + $0x348] sm:$0xff]
    %v268 = vld [vmem:[#allocation2 + $0x350] sm:$0xff]
    %v269 = vld [vmem:[#allocation2 + $0x358] sm:$0xff]
    %v270 = vld [vmem:[#allocation2 + $0x360] sm:$0xff]
    %v271 = vld [vmem:[#allocation2 + $0x368] sm:$0xff]
    %v272 = vld [vmem:[#allocation2 + $0x370] sm:$0xff]
    %v273 = vld [vmem:[#allocation2 + $0x378] sm:$0xff]
    %v274 = vld [vmem:[#allocation2 + $0x380] sm:$0xff]
    %v275 = vld [vmem:[#allocation2 + $0x388] sm:$0xff]
    %v276 = vld [vmem:[#allocation2 + $0x390] sm:$0xff]
    %v277 = vld [vmem:[#allocation2 + $0x398] sm:$0xff]
    %v278 = vld [vmem:[#allocation2 + $0x3a0] sm:$0xff]
    %v279 = vld [vmem:[#allocation2 + $0x3a8] sm:$0xff]
    %v280 = vld [vmem:[#allocation2 + $0x3b0] sm:$0xff]
    %v281 = vld [vmem:[#allocation2 + $0x3b8] sm:$0xff]
    %v282 = vld [vmem:[#allocation2 + $0x3c0] sm:$0xff]
    %v283 = vld [vmem:[#allocation2 + $0x3c8] sm:$0xff]
    %v284 = vld [vmem:[#allocation2 + $0x3d0] sm:$0xff]
    %v285 = vld [vmem:[#allocation2 + $0x3d8] sm:$0xff]
    %v286 = vld [vmem:[#allocation2 + $0x3e0] sm:$0xff]
    %v287 = vld [vmem:[#allocation2 + $0x3e8] sm:$0xff]
    %v288 = vld [vmem:[#allocation2 + $0x3f0] sm:$0xff]
    %v289 = vld [vmem:[#allocation2 + $0x3f8] sm:$0xff]
    %v290 = vld [vmem:[%s3] sm:$0xff]
    %v292 = vunpack.c.l.b16 %v290
    %v293 = vunpack.c.h.b16 %v290
    %v294 = vpack.c.b16 %v292, %v292
    %v295 = vpack.c.b16 %v293, %v293
    %vm296 = vcmask 64512
    %v298 = vsel %vm296, %v160, 0
    %v301 = vsel %vm296, %v161, 0
    %vm303 = vcmask 1043456
    %v305 = vsel %vm303, %v294, 0
    %v308 = vsel %vm303, %v295, 0
    %310 = vmatprep.subr.bf16.mxu0 0
    %311 = vmatpush1.bf16.msra.mxu0 0
    %312 = vmatprep.subr.bf16.mxu0 0
    %313 = vmatpush1.bf16.msra.mxu0 0
    %314 = vmatprep.subr.bf16.mxu0 0
    %315 = vmatpush1.bf16.msra.mxu0 0
    %316 = vmatprep.subr.bf16.mxu0 0
    %317 = vmatpush1.bf16.msra.mxu0 0
    %318 = vmatprep.subr.bf16.mxu0 0
    %319 = vmatpush1.bf16.msra.mxu0 0
    %320 = vmatprep.subr.bf16.mxu0 0
    %321 = vmatpush1.bf16.msra.mxu0 0
    %322 = vmatprep.subr.bf16.mxu0 0
    %323 = vmatpush1.bf16.msra.mxu0 0
    %324 = vmatprep.subr.bf16.mxu0 %v308
    %325 = vmatpush1.bf16.msra.mxu0 %v305
    %326 = vmatprep.subr.bf16.mxu0 0
    %327 = vmatpush2.bf16.msra.mxu0 0
    %328 = vmatprep.subr.bf16.mxu0 0
    %329 = vmatpush2.bf16.msra.mxu0 0
    %330 = vmatprep.subr.bf16.mxu0 0
    %331 = vmatpush2.bf16.msra.mxu0 0
    %332 = vmatprep.subr.bf16.mxu0 0
    %333 = vmatpush2.bf16.msra.mxu0 0
    %334 = vmatprep.subr.bf16.mxu0 0
    %335 = vmatpush2.bf16.msra.mxu0 0
    %336 = vmatprep.subr.bf16.mxu0 0
    %337 = vmatpush2.bf16.msra.mxu0 0
    %338 = vmatprep.subr.bf16.mxu0 0
    %339 = vmatpush2.bf16.msra.mxu0 0
    %340 = vmatprep.subr.bf16.mxu0 0
    %341 = vmatpush2.bf16.msra.mxu0 0
    %342 = vmatprep.mubr.bf16.mxu0 0
    %343 = vmatmul.mubr.bf16.gmra.mxu0 %v298
    %v344 = vpop.f32.mrf.mxu0
    %v345 = vadd.f32 0.0, %v344
    %v346 = vpop.f32.mrf.mxu0
    %v347 = vadd.f32 0.0, %v346
    %v348 = vpop.f32.mrf.mxu0
    %v349 = vadd.f32 0.0, %v348
    %v350 = vpop.f32.mrf.mxu0
    %v351 = vadd.f32 0.0, %v350
    %352 = vmatprep.mubr.bf16.mxu0 0
    %353 = vmatmul.mubr.bf16.gmra.mxu0 %v301
    %v354 = vpop.f32.mrf.mxu0
    %v355 = vadd.f32 0.0, %v354
    %v356 = vpop.f32.mrf.mxu0
    %v357 = vadd.f32 0.0, %v356
    %v358 = vpop.f32.mrf.mxu0
    %v359 = vadd.f32 0.0, %v358
    %v360 = vpop.f32.mrf.mxu0
    %v361 = vadd.f32 0.0, %v360
    %362 = vdwg.mxu0
    %v379 = vunpack.c.l.b16 %v140
    %v380 = vunpack.c.h.b16 %v140
    %v381 = vunpack.c.l.b16 %v141
    %v382 = vunpack.c.h.b16 %v141
    %v383 = vunpack.c.l.b16 %v142
    %v384 = vunpack.c.h.b16 %v142
    %v385 = vunpack.c.l.b16 %v143
    %v386 = vunpack.c.h.b16 %v143
    %v387 = vunpack.c.l.b16 %v144
    %v388 = vunpack.c.h.b16 %v144
    %v389 = vunpack.c.l.b16 %v145
    %v390 = vunpack.c.h.b16 %v145
    %v391 = vunpack.c.l.b16 %v146
    %v392 = vunpack.c.h.b16 %v146
    %v393 = vunpack.c.l.b16 %v147
    %v394 = vunpack.c.h.b16 %v147
    %v395 = vunpack.c.l.b16 %v148
    %v396 = vunpack.c.h.b16 %v148
    %v397 = vunpack.c.l.b16 %v149
    %v398 = vunpack.c.h.b16 %v149
    %v399 = vunpack.c.l.b16 %v150
    %v400 = vunpack.c.h.b16 %v150
    %v401 = vunpack.c.l.b16 %v151
    %v402 = vunpack.c.h.b16 %v151
    %v403 = vunpack.c.l.b16 %v152
    %v404 = vunpack.c.h.b16 %v152
    %v405 = vunpack.c.l.b16 %v153
    %v406 = vunpack.c.h.b16 %v153
    %v407 = vunpack.c.l.b16 %v154
    %v408 = vunpack.c.h.b16 %v154
    %v409 = vunpack.c.l.b16 %v155
    %v410 = vunpack.c.h.b16 %v155
    %v411 = vpack.c.b16 %v387, %v379
    %v412 = vpack.c.b16 %v388, %v380
    %v413 = vpack.c.b16 %v389, %v381
    %v414 = vpack.c.b16 %v390, %v382
    %v415 = vpack.c.b16 %v391, %v383
    %v416 = vpack.c.b16 %v392, %v384
    %v417 = vpack.c.b16 %v393, %v385
    %v418 = vpack.c.b16 %v394, %v386
    %v419 = vpack.c.b16 %v403, %v395
    %v420 = vpack.c.b16 %v404, %v396
    %v421 = vpack.c.b16 %v405, %v397
    %v422 = vpack.c.b16 %v406, %v398
    %v423 = vpack.c.b16 %v407, %v399
    %v424 = vpack.c.b16 %v408, %v400
    %v425 = vpack.c.b16 %v409, %v401
    %v426 = vpack.c.b16 %v410, %v402
    %v571 = vunpack.c.l.b16 %v162
    %v572 = vunpack.c.h.b16 %v162
    %v573 = vunpack.c.l.b16 %v163
    %v574 = vunpack.c.h.b16 %v163
    %v575 = vunpack.c.l.b16 %v164
    %v576 = vunpack.c.h.b16 %v164
    %v577 = vunpack.c.l.b16 %v165
    %v578 = vunpack.c.h.b16 %v165
    %v579 = vunpack.c.l.b16 %v166
    %v580 = vunpack.c.h.b16 %v166
    %v581 = vunpack.c.l.b16 %v167
    %v582 = vunpack.c.h.b16 %v167
    %v583 = vunpack.c.l.b16 %v168
    %v584 = vunpack.c.h.b16 %v168
    %v585 = vunpack.c.l.b16 %v169
    %v586 = vunpack.c.h.b16 %v169
    %v587 = vunpack.c.l.b16 %v170
    %v588 = vunpack.c.h.b16 %v170
    %v589 = vunpack.c.l.b16 %v171
    %v590 = vunpack.c.h.b16 %v171
    %v591 = vunpack.c.l.b16 %v172
    %v592 = vunpack.c.h.b16 %v172
    %v593 = vunpack.c.l.b16 %v173
    %v594 = vunpack.c.h.b16 %v173
    %v595 = vunpack.c.l.b16 %v174
    %v596 = vunpack.c.h.b16 %v174
    %v597 = vunpack.c.l.b16 %v175
    %v598 = vunpack.c.h.b16 %v175
    %v599 = vunpack.c.l.b16 %v176
    %v600 = vunpack.c.h.b16 %v176
    %v601 = vunpack.c.l.b16 %v177
    %v602 = vunpack.c.h.b16 %v177
    %v603 = vunpack.c.l.b16 %v178
    %v604 = vunpack.c.h.b16 %v178
    %v605 = vunpack.c.l.b16 %v179
    %v606 = vunpack.c.h.b16 %v179
    %v607 = vunpack.c.l.b16 %v180
    %v608 = vunpack.c.h.b16 %v180
    %v609 = vunpack.c.l.b16 %v181
    %v610 = vunpack.c.h.b16 %v181
    %v611 = vunpack.c.l.b16 %v182
    %v612 = vunpack.c.h.b16 %v182
    %v613 = vunpack.c.l.b16 %v183
    %v614 = vunpack.c.h.b16 %v183
    %v615 = vunpack.c.l.b16 %v184
    %v616 = vunpack.c.h.b16 %v184
    %v617 = vunpack.c.l.b16 %v185
    %v618 = vunpack.c.h.b16 %v185
    %v619 = vunpack.c.l.b16 %v186
    %v620 = vunpack.c.h.b16 %v186
    %v621 = vunpack.c.l.b16 %v187
    %v622 = vunpack.c.h.b16 %v187
    %v623 = vunpack.c.l.b16 %v188
    %v624 = vunpack.c.h.b16 %v188
    %v625 = vunpack.c.l.b16 %v189
    %v626 = vunpack.c.h.b16 %v189
    %v627 = vunpack.c.l.b16 %v190
    %v628 = vunpack.c.h.b16 %v190
    %v629 = vunpack.c.l.b16 %v191
    %v630 = vunpack.c.h.b16 %v191
    %v631 = vunpack.c.l.b16 %v192
    %v632 = vunpack.c.h.b16 %v192
    %v633 = vunpack.c.l.b16 %v193
    %v634 = vunpack.c.h.b16 %v193
    %v635 = vunpack.c.l.b16 %v194
    %v636 = vunpack.c.h.b16 %v194
    %v637 = vunpack.c.l.b16 %v195
    %v638 = vunpack.c.h.b16 %v195
    %v639 = vunpack.c.l.b16 %v196
    %v640 = vunpack.c.h.b16 %v196
    %v641 = vunpack.c.l.b16 %v197
    %v642 = vunpack.c.h.b16 %v197
    %v643 = vunpack.c.l.b16 %v198
    %v644 = vunpack.c.h.b16 %v198
    %v645 = vunpack.c.l.b16 %v199
    %v646 = vunpack.c.h.b16 %v199
    %v647 = vunpack.c.l.b16 %v200
    %v648 = vunpack.c.h.b16 %v200
    %v649 = vunpack.c.l.b16 %v201
    %v650 = vunpack.c.h.b16 %v201
    %v651 = vunpack.c.l.b16 %v202
    %v652 = vunpack.c.h.b16 %v202
    %v653 = vunpack.c.l.b16 %v203
    %v654 = vunpack.c.h.b16 %v203
    %v655 = vunpack.c.l.b16 %v204
    %v656 = vunpack.c.h.b16 %v204
    %v657 = vunpack.c.l.b16 %v205
    %v658 = vunpack.c.h.b16 %v205
    %v659 = vunpack.c.l.b16 %v206
    %v660 = vunpack.c.h.b16 %v206
    %v661 = vunpack.c.l.b16 %v207
    %v662 = vunpack.c.h.b16 %v207
    %v663 = vunpack.c.l.b16 %v208
    %v664 = vunpack.c.h.b16 %v208
    %v665 = vunpack.c.l.b16 %v209
    %v666 = vunpack.c.h.b16 %v209
    %v667 = vunpack.c.l.b16 %v210
    %v668 = vunpack.c.h.b16 %v210
    %v669 = vunpack.c.l.b16 %v211
    %v670 = vunpack.c.h.b16 %v211
    %v671 = vunpack.c.l.b16 %v212
    %v672 = vunpack.c.h.b16 %v212
    %v673 = vunpack.c.l.b16 %v213
    %v674 = vunpack.c.h.b16 %v213
    %v675 = vunpack.c.l.b16 %v214
    %v676 = vunpack.c.h.b16 %v214
    %v677 = vunpack.c.l.b16 %v215
    %v678 = vunpack.c.h.b16 %v215
    %v679 = vunpack.c.l.b16 %v216
    %v680 = vunpack.c.h.b16 %v216
    %v681 = vunpack.c.l.b16 %v217
    %v682 = vunpack.c.h.b16 %v217
    %v683 = vunpack.c.l.b16 %v218
    %v684 = vunpack.c.h.b16 %v218
    %v685 = vunpack.c.l.b16 %v219
    %v686 = vunpack.c.h.b16 %v219
    %v687 = vunpack.c.l.b16 %v220
    %v688 = vunpack.c.h.b16 %v220
    %v689 = vunpack.c.l.b16 %v221
    %v690 = vunpack.c.h.b16 %v221
    %v691 = vunpack.c.l.b16 %v222
    %v692 = vunpack.c.h.b16 %v222
    %v693 = vunpack.c.l.b16 %v223
    %v694 = vunpack.c.h.b16 %v223
    %v695 = vunpack.c.l.b16 %v224
    %v696 = vunpack.c.h.b16 %v224
    %v697 = vunpack.c.l.b16 %v225
    %v698 = vunpack.c.h.b16 %v225
    %v699 = vunpack.c.l.b16 %v226
    %v700 = vunpack.c.h.b16 %v226
    %v701 = vunpack.c.l.b16 %v227
    %v702 = vunpack.c.h.b16 %v227
    %v703 = vunpack.c.l.b16 %v228
    %v704 = vunpack.c.h.b16 %v228
    %v705 = vunpack.c.l.b16 %v229
    %v706 = vunpack.c.h.b16 %v229
    %v707 = vunpack.c.l.b16 %v230
    %v708 = vunpack.c.h.b16 %v230
    %v709 = vunpack.c.l.b16 %v231
    %v710 = vunpack.c.h.b16 %v231
    %v711 = vunpack.c.l.b16 %v232
    %v712 = vunpack.c.h.b16 %v232
    %v713 = vunpack.c.l.b16 %v233
    %v714 = vunpack.c.h.b16 %v233
    %v715 = vunpack.c.l.b16 %v234
    %v716 = vunpack.c.h.b16 %v234
    %v717 = vunpack.c.l.b16 %v235
    %v718 = vunpack.c.h.b16 %v235
    %v719 = vunpack.c.l.b16 %v236
    %v720 = vunpack.c.h.b16 %v236
    %v721 = vunpack.c.l.b16 %v237
    %v722 = vunpack.c.h.b16 %v237
    %v723 = vunpack.c.l.b16 %v238
    %v724 = vunpack.c.h.b16 %v238
    %v725 = vunpack.c.l.b16 %v239
    %v726 = vunpack.c.h.b16 %v239
    %v727 = vunpack.c.l.b16 %v240
    %v728 = vunpack.c.h.b16 %v240
    %v729 = vunpack.c.l.b16 %v241
    %v730 = vunpack.c.h.b16 %v241
    %v731 = vunpack.c.l.b16 %v242
    %v732 = vunpack.c.h.b16 %v242
    %v733 = vunpack.c.l.b16 %v243
    %v734 = vunpack.c.h.b16 %v243
    %v735 = vunpack.c.l.b16 %v244
    %v736 = vunpack.c.h.b16 %v244
    %v737 = vunpack.c.l.b16 %v245
    %v738 = vunpack.c.h.b16 %v245
    %v739 = vunpack.c.l.b16 %v246
    %v740 = vunpack.c.h.b16 %v246
    %v741 = vunpack.c.l.b16 %v247
    %v742 = vunpack.c.h.b16 %v247
    %v743 = vunpack.c.l.b16 %v248
    %v744 = vunpack.c.h.b16 %v248
    %v745 = vunpack.c.l.b16 %v249
    %v746 = vunpack.c.h.b16 %v249
    %v747 = vunpack.c.l.b16 %v250
    %v748 = vunpack.c.h.b16 %v250
    %v749 = vunpack.c.l.b16 %v251
    %v750 = vunpack.c.h.b16 %v251
    %v751 = vunpack.c.l.b16 %v252
    %v752 = vunpack.c.h.b16 %v252
    %v753 = vunpack.c.l.b16 %v253
    %v754 = vunpack.c.h.b16 %v253
    %v755 = vunpack.c.l.b16 %v254
    %v756 = vunpack.c.h.b16 %v254
    %v757 = vunpack.c.l.b16 %v255
    %v758 = vunpack.c.h.b16 %v255
    %v759 = vunpack.c.l.b16 %v256
    %v760 = vunpack.c.h.b16 %v256
    %v761 = vunpack.c.l.b16 %v257
    %v762 = vunpack.c.h.b16 %v257
    %v763 = vunpack.c.l.b16 %v258
    %v764 = vunpack.c.h.b16 %v258
    %v765 = vunpack.c.l.b16 %v259
    %v766 = vunpack.c.h.b16 %v259
    %v767 = vunpack.c.l.b16 %v260
    %v768 = vunpack.c.h.b16 %v260
    %v769 = vunpack.c.l.b16 %v261
    %v770 = vunpack.c.h.b16 %v261
    %v771 = vunpack.c.l.b16 %v262
    %v772 = vunpack.c.h.b16 %v262
    %v773 = vunpack.c.l.b16 %v263
    %v774 = vunpack.c.h.b16 %v263
    %v775 = vunpack.c.l.b16 %v264
    %v776 = vunpack.c.h.b16 %v264
    %v777 = vunpack.c.l.b16 %v265
    %v778 = vunpack.c.h.b16 %v265
    %v779 = vunpack.c.l.b16 %v266
    %v780 = vunpack.c.h.b16 %v266
    %v781 = vunpack.c.l.b16 %v267
    %v782 = vunpack.c.h.b16 %v267
    %v783 = vunpack.c.l.b16 %v268
    %v784 = vunpack.c.h.b16 %v268
    %v785 = vunpack.c.l.b16 %v269
    %v786 = vunpack.c.h.b16 %v269
    %v787 = vunpack.c.l.b16 %v270
    %v788 = vunpack.c.h.b16 %v270
    %v789 = vunpack.c.l.b16 %v271
    %v790 = vunpack.c.h.b16 %v271
    %v791 = vunpack.c.l.b16 %v272
    %v792 = vunpack.c.h.b16 %v272
    %v793 = vunpack.c.l.b16 %v273
    %v794 = vunpack.c.h.b16 %v273
    %v795 = vunpack.c.l.b16 %v274
    %v796 = vunpack.c.h.b16 %v274
    %v797 = vunpack.c.l.b16 %v275
    %v798 = vunpack.c.h.b16 %v275
    %v799 = vunpack.c.l.b16 %v276
    %v800 = vunpack.c.h.b16 %v276
    %v801 = vunpack.c.l.b16 %v277
    %v802 = vunpack.c.h.b16 %v277
    %v803 = vunpack.c.l.b16 %v278
    %v804 = vunpack.c.h.b16 %v278
    %v805 = vunpack.c.l.b16 %v279
    %v806 = vunpack.c.h.b16 %v279
    %v807 = vunpack.c.l.b16 %v280
    %v808 = vunpack.c.h.b16 %v280
    %v809 = vunpack.c.l.b16 %v281
    %v810 = vunpack.c.h.b16 %v281
    %v811 = vunpack.c.l.b16 %v282
    %v812 = vunpack.c.h.b16 %v282
    %v813 = vunpack.c.l.b16 %v283
    %v814 = vunpack.c.h.b16 %v283
    %v815 = vunpack.c.l.b16 %v284
    %v816 = vunpack.c.h.b16 %v284
    %v817 = vunpack.c.l.b16 %v285
    %v818 = vunpack.c.h.b16 %v285
    %v819 = vunpack.c.l.b16 %v286
    %v820 = vunpack.c.h.b16 %v286
    %v821 = vunpack.c.l.b16 %v287
    %v822 = vunpack.c.h.b16 %v287
    %v823 = vunpack.c.l.b16 %v288
    %v824 = vunpack.c.h.b16 %v288
    %v825 = vunpack.c.l.b16 %v289
    %v826 = vunpack.c.h.b16 %v289
    %v827 = vpack.c.b16 %v573, %v571
    %v828 = vpack.c.b16 %v574, %v572
    %v829 = vpack.c.b16 %v577, %v575
    %v830 = vpack.c.b16 %v578, %v576
    %v831 = vpack.c.b16 %v581, %v579
    %v832 = vpack.c.b16 %v582, %v580
    %v833 = vpack.c.b16 %v585, %v583
    %v834 = vpack.c.b16 %v586, %v584
    %v835 = vpack.c.b16 %v589, %v587
    %v836 = vpack.c.b16 %v590, %v588
    %v837 = vpack.c.b16 %v593, %v591
    %v838 = vpack.c.b16 %v594, %v592
    %v839 = vpack.c.b16 %v597, %v595
    %v840 = vpack.c.b16 %v598, %v596
    %v841 = vpack.c.b16 %v601, %v599
    %v842 = vpack.c.b16 %v602, %v600
    %v843 = vpack.c.b16 %v605, %v603
    %v844 = vpack.c.b16 %v606, %v604
    %v845 = vpack.c.b16 %v609, %v607
    %v846 = vpack.c.b16 %v610, %v608
    %v847 = vpack.c.b16 %v613, %v611
    %v848 = vpack.c.b16 %v614, %v612
    %v849 = vpack.c.b16 %v617, %v615
    %v850 = vpack.c.b16 %v618, %v616
    %v851 = vpack.c.b16 %v621, %v619
    %v852 = vpack.c.b16 %v622, %v620
    %v853 = vpack.c.b16 %v625, %v623
    %v854 = vpack.c.b16 %v626, %v624
    %v855 = vpack.c.b16 %v629, %v627
    %v856 = vpack.c.b16 %v630, %v628
    %v857 = vpack.c.b16 %v633, %v631
    %v858 = vpack.c.b16 %v634, %v632
    %v859 = vpack.c.b16 %v637, %v635
    %v860 = vpack.c.b16 %v638, %v636
    %v861 = vpack.c.b16 %v641, %v639
    %v862 = vpack.c.b16 %v642, %v640
    %v863 = vpack.c.b16 %v645, %v643
    %v864 = vpack.c.b16 %v646, %v644
    %v865 = vpack.c.b16 %v649, %v647
    %v866 = vpack.c.b16 %v650, %v648
    %v867 = vpack.c.b16 %v653, %v651
    %v868 = vpack.c.b16 %v654, %v652
    %v869 = vpack.c.b16 %v657, %v655
    %v870 = vpack.c.b16 %v658, %v656
    %v871 = vpack.c.b16 %v661, %v659
    %v872 = vpack.c.b16 %v662, %v660
    %v873 = vpack.c.b16 %v665, %v663
    %v874 = vpack.c.b16 %v666, %v664
    %v875 = vpack.c.b16 %v669, %v667
    %v876 = vpack.c.b16 %v670, %v668
    %v877 = vpack.c.b16 %v673, %v671
    %v878 = vpack.c.b16 %v674, %v672
    %v879 = vpack.c.b16 %v677, %v675
    %v880 = vpack.c.b16 %v678, %v676
    %v881 = vpack.c.b16 %v681, %v679
    %v882 = vpack.c.b16 %v682, %v680
    %v883 = vpack.c.b16 %v685, %v683
    %v884 = vpack.c.b16 %v686, %v684
    %v885 = vpack.c.b16 %v689, %v687
    %v886 = vpack.c.b16 %v690, %v688
    %v887 = vpack.c.b16 %v693, %v691
    %v888 = vpack.c.b16 %v694, %v692
    %v889 = vpack.c.b16 %v697, %v695
    %v890 = vpack.c.b16 %v698, %v696
    %v891 = vpack.c.b16 %v701, %v699
    %v892 = vpack.c.b16 %v702, %v700
    %v893 = vpack.c.b16 %v705, %v703
    %v894 = vpack.c.b16 %v706, %v704
    %v895 = vpack.c.b16 %v709, %v707
    %v896 = vpack.c.b16 %v710, %v708
    %v897 = vpack.c.b16 %v713, %v711
    %v898 = vpack.c.b16 %v714, %v712
    %v899 = vpack.c.b16 %v717, %v715
    %v900 = vpack.c.b16 %v718, %v716
    %v901 = vpack.c.b16 %v721, %v719
    %v902 = vpack.c.b16 %v722, %v720
    %v903 = vpack.c.b16 %v725, %v723
    %v904 = vpack.c.b16 %v726, %v724
    %v905 = vpack.c.b16 %v729, %v727
    %v906 = vpack.c.b16 %v730, %v728
    %v907 = vpack.c.b16 %v733, %v731
    %v908 = vpack.c.b16 %v734, %v732
    %v909 = vpack.c.b16 %v737, %v735
    %v910 = vpack.c.b16 %v738, %v736
    %v911 = vpack.c.b16 %v741, %v739
    %v912 = vpack.c.b16 %v742, %v740
    %v913 = vpack.c.b16 %v745, %v743
    %v914 = vpack.c.b16 %v746, %v744
    %v915 = vpack.c.b16 %v749, %v747
    %v916 = vpack.c.b16 %v750, %v748
    %v917 = vpack.c.b16 %v753, %v751
    %v918 = vpack.c.b16 %v754, %v752
    %v919 = vpack.c.b16 %v757, %v755
    %v920 = vpack.c.b16 %v758, %v756
    %v921 = vpack.c.b16 %v761, %v759
    %v922 = vpack.c.b16 %v762, %v760
    %v923 = vpack.c.b16 %v765, %v763
    %v924 = vpack.c.b16 %v766, %v764
    %v925 = vpack.c.b16 %v769, %v767
    %v926 = vpack.c.b16 %v770, %v768
    %v927 = vpack.c.b16 %v773, %v771
    %v928 = vpack.c.b16 %v774, %v772
    %v929 = vpack.c.b16 %v777, %v775
    %v930 = vpack.c.b16 %v778, %v776
    %v931 = vpack.c.b16 %v781, %v779
    %v932 = vpack.c.b16 %v782, %v780
    %v933 = vpack.c.b16 %v785, %v783
    %v934 = vpack.c.b16 %v786, %v784
    %v935 = vpack.c.b16 %v789, %v787
    %v936 = vpack.c.b16 %v790, %v788
    %v937 = vpack.c.b16 %v793, %v791
    %v938 = vpack.c.b16 %v794, %v792
    %v939 = vpack.c.b16 %v797, %v795
    %v940 = vpack.c.b16 %v798, %v796
    %v941 = vpack.c.b16 %v801, %v799
    %v942 = vpack.c.b16 %v802, %v800
    %v943 = vpack.c.b16 %v805, %v803
    %v944 = vpack.c.b16 %v806, %v804
    %v945 = vpack.c.b16 %v809, %v807
    %v946 = vpack.c.b16 %v810, %v808
    %v947 = vpack.c.b16 %v813, %v811
    %v948 = vpack.c.b16 %v814, %v812
    %v949 = vpack.c.b16 %v817, %v815
    %v950 = vpack.c.b16 %v818, %v816
    %v951 = vpack.c.b16 %v821, %v819
    %v952 = vpack.c.b16 %v822, %v820
    %v953 = vpack.c.b16 %v825, %v823
    %v954 = vpack.c.b16 %v826, %v824
    %1083 = vmatprep.subr.bf16.mxu0 %v842
    %1084 = vmatpush1.bf16.msra.mxu0 %v841
    %1085 = vmatprep.subr.bf16.mxu0 %v840
    %1086 = vmatpush1.bf16.msra.mxu0 %v839
    %1087 = vmatprep.subr.bf16.mxu0 %v838
    %1088 = vmatpush1.bf16.msra.mxu0 %v837
    %1089 = vmatprep.subr.bf16.mxu0 %v836
    %1090 = vmatpush1.bf16.msra.mxu0 %v835
    %1091 = vmatprep.subr.bf16.mxu0 %v834
    %1092 = vmatpush1.bf16.msra.mxu0 %v833
    %1093 = vmatprep.subr.bf16.mxu0 %v832
    %1094 = vmatpush1.bf16.msra.mxu0 %v831
    %1095 = vmatprep.subr.bf16.mxu0 %v830
    %1096 = vmatpush1.bf16.msra.mxu0 %v829
    %1097 = vmatprep.subr.bf16.mxu0 %v828
    %1098 = vmatpush1.bf16.msra.mxu0 %v827
    %1099 = vmatprep.subr.bf16.mxu0 %v858
    %1100 = vmatpush2.bf16.msra.mxu0 %v857
    %1101 = vmatprep.subr.bf16.mxu0 %v856
    %1102 = vmatpush2.bf16.msra.mxu0 %v855
    %1103 = vmatprep.subr.bf16.mxu0 %v854
    %1104 = vmatpush2.bf16.msra.mxu0 %v853
    %1105 = vmatprep.subr.bf16.mxu0 %v852
    %1106 = vmatpush2.bf16.msra.mxu0 %v851
    %1107 = vmatprep.subr.bf16.mxu0 %v850
    %1108 = vmatpush2.bf16.msra.mxu0 %v849
    %1109 = vmatprep.subr.bf16.mxu0 %v848
    %1110 = vmatpush2.bf16.msra.mxu0 %v847
    %1111 = vmatprep.subr.bf16.mxu0 %v846
    %1112 = vmatpush2.bf16.msra.mxu0 %v845
    %1113 = vmatprep.subr.bf16.mxu0 %v844
    %1114 = vmatpush2.bf16.msra.mxu0 %v843
    %1115 = vmatprep.mubr.bf16.mxu0 %v412
    %1116 = vmatmul.mubr.bf16.gmra.mxu0 %v411
    %v1117 = vpop.f32.mrf.mxu0
    %v1118 = vadd.f32 %v345, %v1117
    %v1119 = vpop.f32.mrf.mxu0
    %v1120 = vadd.f32 %v347, %v1119
    %v1121 = vpop.f32.mrf.mxu0
    %v1122 = vadd.f32 %v349, %v1121
    %v1123 = vpop.f32.mrf.mxu0
    %v1124 = vadd.f32 %v351, %v1123
    %1125 = vmatprep.mubr.bf16.mxu0 %v420
    %1126 = vmatmul.mubr.bf16.gmra.mxu0 %v419
    %v1127 = vpop.f32.mrf.mxu0
    %v1128 = vadd.f32 %v355, %v1127
    %v1129 = vpop.f32.mrf.mxu0
    %v1130 = vadd.f32 %v357, %v1129
    %v1131 = vpop.f32.mrf.mxu0
    %v1132 = vadd.f32 %v359, %v1131
    %v1133 = vpop.f32.mrf.mxu0
    %v1134 = vadd.f32 %v361, %v1133
    %1135 = vdwg.mxu0
    %1136 = vmatprep.subr.bf16.mxu0 %v874
    %1137 = vmatpush1.bf16.msra.mxu0 %v873
    %1138 = vmatprep.subr.bf16.mxu0 %v872
    %1139 = vmatpush1.bf16.msra.mxu0 %v871
    %1140 = vmatprep.subr.bf16.mxu0 %v870
    %1141 = vmatpush1.bf16.msra.mxu0 %v869
    %1142 = vmatprep.subr.bf16.mxu0 %v868
    %1143 = vmatpush1.bf16.msra.mxu0 %v867
    %1144 = vmatprep.subr.bf16.mxu0 %v866
    %1145 = vmatpush1.bf16.msra.mxu0 %v865
    %1146 = vmatprep.subr.bf16.mxu0 %v864
    %1147 = vmatpush1.bf16.msra.mxu0 %v863
    %1148 = vmatprep.subr.bf16.mxu0 %v862
    %1149 = vmatpush1.bf16.msra.mxu0 %v861
    %1150 = vmatprep.subr.bf16.mxu0 %v860
    %1151 = vmatpush1.bf16.msra.mxu0 %v859
    %1152 = vmatprep.subr.bf16.mxu0 %v890
    %1153 = vmatpush2.bf16.msra.mxu0 %v889
    %1154 = vmatprep.subr.bf16.mxu0 %v888
    %1155 = vmatpush2.bf16.msra.mxu0 %v887
    %1156 = vmatprep.subr.bf16.mxu0 %v886
    %1157 = vmatpush2.bf16.msra.mxu0 %v885
    %1158 = vmatprep.subr.bf16.mxu0 %v884
    %1159 = vmatpush2.bf16.msra.mxu0 %v883
    %1160 = vmatprep.subr.bf16.mxu0 %v882
    %1161 = vmatpush2.bf16.msra.mxu0 %v881
    %1162 = vmatprep.subr.bf16.mxu0 %v880
    %1163 = vmatpush2.bf16.msra.mxu0 %v879
    %1164 = vmatprep.subr.bf16.mxu0 %v878
    %1165 = vmatpush2.bf16.msra.mxu0 %v877
    %1166 = vmatprep.subr.bf16.mxu0 %v876
    %1167 = vmatpush2.bf16.msra.mxu0 %v875
    %1168 = vmatprep.mubr.bf16.mxu0 %v414
    %1169 = vmatmul.mubr.bf16.gmra.mxu0 %v413
    %v1170 = vpop.f32.mrf.mxu0
    %v1171 = vadd.f32 %v1118, %v1170
    %v1172 = vpop.f32.mrf.mxu0
    %v1173 = vadd.f32 %v1120, %v1172
    %v1174 = vpop.f32.mrf.mxu0
    %v1175 = vadd.f32 %v1122, %v1174
    %v1176 = vpop.f32.mrf.mxu0
    %v1177 = vadd.f32 %v1124, %v1176
    %1178 = vmatprep.mubr.bf16.mxu0 %v422
    %1179 = vmatmul.mubr.bf16.gmra.mxu0 %v421
    %v1180 = vpop.f32.mrf.mxu0
    %v1181 = vadd.f32 %v1128, %v1180
    %v1182 = vpop.f32.mrf.mxu0
    %v1183 = vadd.f32 %v1130, %v1182
    %v1184 = vpop.f32.mrf.mxu0
    %v1185 = vadd.f32 %v1132, %v1184
    %v1186 = vpop.f32.mrf.mxu0
    %v1187 = vadd.f32 %v1134, %v1186
    %1188 = vdwg.mxu0
    %1189 = vmatprep.subr.bf16.mxu0 %v906
    %1190 = vmatpush1.bf16.msra.mxu0 %v905
    %1191 = vmatprep.subr.bf16.mxu0 %v904
    %1192 = vmatpush1.bf16.msra.mxu0 %v903
    %1193 = vmatprep.subr.bf16.mxu0 %v902
    %1194 = vmatpush1.bf16.msra.mxu0 %v901
    %1195 = vmatprep.subr.bf16.mxu0 %v900
    %1196 = vmatpush1.bf16.msra.mxu0 %v899
    %1197 = vmatprep.subr.bf16.mxu0 %v898
    %1198 = vmatpush1.bf16.msra.mxu0 %v897
    %1199 = vmatprep.subr.bf16.mxu0 %v896
    %1200 = vmatpush1.bf16.msra.mxu0 %v895
    %1201 = vmatprep.subr.bf16.mxu0 %v894
    %1202 = vmatpush1.bf16.msra.mxu0 %v893
    %1203 = vmatprep.subr.bf16.mxu0 %v892
    %1204 = vmatpush1.bf16.msra.mxu0 %v891
    %1205 = vmatprep.subr.bf16.mxu0 %v922
    %1206 = vmatpush2.bf16.msra.mxu0 %v921
    %1207 = vmatprep.subr.bf16.mxu0 %v920
    %1208 = vmatpush2.bf16.msra.mxu0 %v919
    %1209 = vmatprep.subr.bf16.mxu0 %v918
    %1210 = vmatpush2.bf16.msra.mxu0 %v917
    %1211 = vmatprep.subr.bf16.mxu0 %v916
    %1212 = vmatpush2.bf16.msra.mxu0 %v915
    %1213 = vmatprep.subr.bf16.mxu0 %v914
    %1214 = vmatpush2.bf16.msra.mxu0 %v913
    %1215 = vmatprep.subr.bf16.mxu0 %v912
    %1216 = vmatpush2.bf16.msra.mxu0 %v911
    %1217 = vmatprep.subr.bf16.mxu0 %v910
    %1218 = vmatpush2.bf16.msra.mxu0 %v909
    %1219 = vmatprep.subr.bf16.mxu0 %v908
    %1220 = vmatpush2.bf16.msra.mxu0 %v907
    %1221 = vmatprep.mubr.bf16.mxu0 %v416
    %1222 = vmatmul.mubr.bf16.gmra.mxu0 %v415
    %v1223 = vpop.f32.mrf.mxu0
    %v1224 = vadd.f32 %v1171, %v1223
    %v1225 = vpop.f32.mrf.mxu0
    %v1226 = vadd.f32 %v1173, %v1225
    %v1227 = vpop.f32.mrf.mxu0
    %v1228 = vadd.f32 %v1175, %v1227
    %v1229 = vpop.f32.mrf.mxu0
    %v1230 = vadd.f32 %v1177, %v1229
    %1231 = vmatprep.mubr.bf16.mxu0 %v424
    %1232 = vmatmul.mubr.bf16.gmra.mxu0 %v423
    %v1233 = vpop.f32.mrf.mxu0
    %v1234 = vadd.f32 %v1181, %v1233
    %v1235 = vpop.f32.mrf.mxu0
    %v1236 = vadd.f32 %v1183, %v1235
    %v1237 = vpop.f32.mrf.mxu0
    %v1238 = vadd.f32 %v1185, %v1237
    %v1239 = vpop.f32.mrf.mxu0
    %v1240 = vadd.f32 %v1187, %v1239
    %1241 = vdwg.mxu0
    %1242 = vmatprep.subr.bf16.mxu0 %v938
    %1243 = vmatpush1.bf16.msra.mxu0 %v937
    %1244 = vmatprep.subr.bf16.mxu0 %v936
    %1245 = vmatpush1.bf16.msra.mxu0 %v935
    %1246 = vmatprep.subr.bf16.mxu0 %v934
    %1247 = vmatpush1.bf16.msra.mxu0 %v933
    %1248 = vmatprep.subr.bf16.mxu0 %v932
    %1249 = vmatpush1.bf16.msra.mxu0 %v931
    %1250 = vmatprep.subr.bf16.mxu0 %v930
    %1251 = vmatpush1.bf16.msra.mxu0 %v929
    %1252 = vmatprep.subr.bf16.mxu0 %v928
    %1253 = vmatpush1.bf16.msra.mxu0 %v927
    %1254 = vmatprep.subr.bf16.mxu0 %v926
    %1255 = vmatpush1.bf16.msra.mxu0 %v925
    %1256 = vmatprep.subr.bf16.mxu0 %v924
    %1257 = vmatpush1.bf16.msra.mxu0 %v923
    %1258 = vmatprep.subr.bf16.mxu0 %v954
    %1259 = vmatpush2.bf16.msra.mxu0 %v953
    %1260 = vmatprep.subr.bf16.mxu0 %v952
    %1261 = vmatpush2.bf16.msra.mxu0 %v951
    %1262 = vmatprep.subr.bf16.mxu0 %v950
    %1263 = vmatpush2.bf16.msra.mxu0 %v949
    %1264 = vmatprep.subr.bf16.mxu0 %v948
    %1265 = vmatpush2.bf16.msra.mxu0 %v947
    %1266 = vmatprep.subr.bf16.mxu0 %v946
    %1267 = vmatpush2.bf16.msra.mxu0 %v945
    %1268 = vmatprep.subr.bf16.mxu0 %v944
    %1269 = vmatpush2.bf16.msra.mxu0 %v943
    %1270 = vmatprep.subr.bf16.mxu0 %v942
    %1271 = vmatpush2.bf16.msra.mxu0 %v941
    %1272 = vmatprep.subr.bf16.mxu0 %v940
    %1273 = vmatpush2.bf16.msra.mxu0 %v939
    %1274 = vmatprep.mubr.bf16.mxu0 %v418
    %1275 = vmatmul.mubr.bf16.gmra.mxu0 %v417
    %v1276 = vpop.f32.mrf.mxu0
    %v1277 = vadd.f32 %v1224, %v1276
    %v1278 = vpop.f32.mrf.mxu0
    %v1279 = vadd.f32 %v1226, %v1278
    %v1280 = vpop.f32.mrf.mxu0
    %v1281 = vadd.f32 %v1228, %v1280
    %v1282 = vpop.f32.mrf.mxu0
    %v1283 = vadd.f32 %v1230, %v1282
    %1284 = vmatprep.mubr.bf16.mxu0 %v426
    %1285 = vmatmul.mubr.bf16.gmra.mxu0 %v425
    %v1286 = vpop.f32.mrf.mxu0
    %v1287 = vadd.f32 %v1234, %v1286
    %v1288 = vpop.f32.mrf.mxu0
    %v1289 = vadd.f32 %v1236, %v1288
    %v1290 = vpop.f32.mrf.mxu0
    %v1291 = vadd.f32 %v1238, %v1290
    %v1292 = vpop.f32.mrf.mxu0
    %v1293 = vadd.f32 %v1240, %v1292
    %1294 = vdwg.mxu0
    %v1295 = vld [vmem:[%s4] sm:$0x3]
    %v1297 = vlaneseq
    %v1298 = vshrl.u32 %v1297, 7
    %v1299 = vsub.s32 0, %v1298
    %v1300 = vrot.slane %v1295, %v1299
    %v1301 = vlaneseq
    %v1302 = vshrl.u32 %v1301, 7
    %v1303 = vsub.s32 1, %v1302
    %v1304 = vrot.slane %v1295, %v1303
    %v1307 = vadd.f32 %v1277, %v1300
    %v1308 = vadd.f32 %v1279, %v1304
    %v1309 = vadd.f32 %v1281, %v1300
    %v1310 = vadd.f32 %v1283, %v1304
    %v1311 = vadd.f32 %v1287, %v1300
    %v1312 = vadd.f32 %v1289, %v1304
    %v1313 = vadd.f32 %v1291, %v1300
    %v1314 = vadd.f32 %v1293, %v1304
    %v1315 = vmax.f32 %v1307, 0.0
    %v1316 = vmax.f32 %v1308, 0.0
    %v1317 = vmax.f32 %v1309, 0.0
    %v1318 = vmax.f32 %v1310, 0.0
    %v1319 = vmax.f32 %v1311, 0.0
    %v1320 = vmax.f32 %v1312, 0.0
    %v1321 = vmax.f32 %v1313, 0.0
    %v1322 = vmax.f32 %v1314, 0.0
    %v1323 = vpack.c.bf16 %v1317, %v1315
    %v1324 = vpack.c.bf16 %v1318, %v1316
    %v1325 = vpack.c.bf16 %v1321, %v1319
    %v1326 = vpack.c.bf16 %v1322, %v1320
    %v1327 = vld [vmem:[#allocation5] sm:$0xf]
    %v1328 = vld [vmem:[#allocation5 + $0x4] sm:$0xf]
    %v1329 = vld [vmem:[#allocation5 + $0x8] sm:$0xf]
    %v1330 = vld [vmem:[#allocation5 + $0xc] sm:$0xf]
    %v1331 = vld [vmem:[#allocation5 + $0x10] sm:$0xf]
    %v1332 = vld [vmem:[#allocation5 + $0x14] sm:$0xf]
    %v1333 = vld [vmem:[#allocation5 + $0x18] sm:$0xf]
    %v1334 = vld [vmem:[#allocation5 + $0x1c] sm:$0xf]
    %v1335 = vld [vmem:[#allocation5 + $0x20] sm:$0xf]
    %v1336 = vld [vmem:[#allocation5 + $0x24] sm:$0xf]
    %v1337 = vld [vmem:[#allocation5 + $0x28] sm:$0xf]
    %v1338 = vld [vmem:[#allocation5 + $0x2c] sm:$0xf]
    %v1339 = vld [vmem:[#allocation5 + $0x30] sm:$0xf]
    %v1340 = vld [vmem:[#allocation5 + $0x34] sm:$0xf]
    %v1341 = vld [vmem:[#allocation5 + $0x38] sm:$0xf]
    %v1342 = vld [vmem:[#allocation5 + $0x3c] sm:$0xf]
    %v1343 = vld [vmem:[#allocation5 + $0x40] sm:$0xf]
    %v1344 = vld [vmem:[#allocation5 + $0x44] sm:$0xf]
    %v1345 = vld [vmem:[#allocation5 + $0x48] sm:$0xf]
    %v1346 = vld [vmem:[#allocation5 + $0x4c] sm:$0xf]
    %v1347 = vld [vmem:[#allocation5 + $0x50] sm:$0xf]
    %v1348 = vld [vmem:[#allocation5 + $0x54] sm:$0xf]
    %v1349 = vld [vmem:[#allocation5 + $0x58] sm:$0xf]
    %v1350 = vld [vmem:[#allocation5 + $0x5c] sm:$0xf]
    %v1351 = vld [vmem:[#allocation5 + $0x60] sm:$0xf]
    %v1352 = vld [vmem:[#allocation5 + $0x64] sm:$0xf]
    %v1353 = vld [vmem:[#allocation5 + $0x68] sm:$0xf]
    %v1354 = vld [vmem:[#allocation5 + $0x6c] sm:$0xf]
    %v1355 = vld [vmem:[#allocation5 + $0x70] sm:$0xf]
    %v1356 = vld [vmem:[#allocation5 + $0x74] sm:$0xf]
    %v1357 = vld [vmem:[#allocation5 + $0x78] sm:$0xf]
    %v1358 = vld [vmem:[#allocation5 + $0x7c] sm:$0xf]
    %v1359 = vld [vmem:[%s6] sm:$0x1]
    %v1361 = vlaneseq
    %v1362 = vshrl.u32 %v1361, 7
    %v1363 = vsub.s32 0, %v1362
    %v1364 = vrot.slane %v1359, %v1363
    %v1398 = vunpack.c.l.b16 %v1327
    %v1399 = vunpack.c.l.b16 %v1328
    %v1400 = vunpack.c.l.b16 %v1329
    %v1401 = vunpack.c.l.b16 %v1330
    %v1402 = vunpack.c.l.b16 %v1331
    %v1403 = vunpack.c.l.b16 %v1332
    %v1404 = vunpack.c.l.b16 %v1333
    %v1405 = vunpack.c.l.b16 %v1334
    %v1406 = vunpack.c.l.b16 %v1335
    %v1407 = vunpack.c.l.b16 %v1336
    %v1408 = vunpack.c.l.b16 %v1337
    %v1409 = vunpack.c.l.b16 %v1338
    %v1410 = vunpack.c.l.b16 %v1339
    %v1411 = vunpack.c.l.b16 %v1340
    %v1412 = vunpack.c.l.b16 %v1341
    %v1413 = vunpack.c.l.b16 %v1342
    %v1414 = vunpack.c.l.b16 %v1343
    %v1415 = vunpack.c.l.b16 %v1344
    %v1416 = vunpack.c.l.b16 %v1345
    %v1417 = vunpack.c.l.b16 %v1346
    %v1418 = vunpack.c.l.b16 %v1347
    %v1419 = vunpack.c.l.b16 %v1348
    %v1420 = vunpack.c.l.b16 %v1349
    %v1421 = vunpack.c.l.b16 %v1350
    %v1422 = vunpack.c.l.b16 %v1351
    %v1423 = vunpack.c.l.b16 %v1352
    %v1424 = vunpack.c.l.b16 %v1353
    %v1425 = vunpack.c.l.b16 %v1354
    %v1426 = vunpack.c.l.b16 %v1355
    %v1427 = vunpack.c.l.b16 %v1356
    %v1428 = vunpack.c.l.b16 %v1357
    %v1429 = vunpack.c.l.b16 %v1358
    %v1430 = vpack.c.b16 %v1399, %v1398
    %v1431 = vpack.c.b16 %v1401, %v1400
    %v1432 = vpack.c.b16 %v1403, %v1402
    %v1433 = vpack.c.b16 %v1405, %v1404
    %v1434 = vpack.c.b16 %v1407, %v1406
    %v1435 = vpack.c.b16 %v1409, %v1408
    %v1436 = vpack.c.b16 %v1411, %v1410
    %v1437 = vpack.c.b16 %v1413, %v1412
    %v1438 = vpack.c.b16 %v1415, %v1414
    %v1439 = vpack.c.b16 %v1417, %v1416
    %v1440 = vpack.c.b16 %v1419, %v1418
    %v1441 = vpack.c.b16 %v1421, %v1420
    %v1442 = vpack.c.b16 %v1423, %v1422
    %v1443 = vpack.c.b16 %v1425, %v1424
    %v1444 = vpack.c.b16 %v1427, %v1426
    %v1445 = vpack.c.b16 %v1429, %v1428
    %1462 = vmatprep.subr.bf16.mxu0 0
    %1463 = vmatpush1.bf16.msra.mxu0 %v1437
    %1464 = vmatprep.subr.bf16.mxu0 0
    %1465 = vmatpush1.bf16.msra.mxu0 %v1436
    %1466 = vmatprep.subr.bf16.mxu0 0
    %1467 = vmatpush1.bf16.msra.mxu0 %v1435
    %1468 = vmatprep.subr.bf16.mxu0 0
    %1469 = vmatpush1.bf16.msra.mxu0 %v1434
    %1470 = vmatprep.subr.bf16.mxu0 0
    %1471 = vmatpush1.bf16.msra.mxu0 %v1433
    %1472 = vmatprep.subr.bf16.mxu0 0
    %1473 = vmatpush1.bf16.msra.mxu0 %v1432
    %1474 = vmatprep.subr.bf16.mxu0 0
    %1475 = vmatpush1.bf16.msra.mxu0 %v1431
    %1476 = vmatprep.subr.bf16.mxu0 0
    %1477 = vmatpush1.bf16.msra.mxu0 %v1430
    %1478 = vmatprep.subr.bf16.mxu0 0
    %1479 = vmatpush2.bf16.msra.mxu0 %v1445
    %1480 = vmatprep.subr.bf16.mxu0 0
    %1481 = vmatpush2.bf16.msra.mxu0 %v1444
    %1482 = vmatprep.subr.bf16.mxu0 0
    %1483 = vmatpush2.bf16.msra.mxu0 %v1443
    %1484 = vmatprep.subr.bf16.mxu0 0
    %1485 = vmatpush2.bf16.msra.mxu0 %v1442
    %1486 = vmatprep.subr.bf16.mxu0 0
    %1487 = vmatpush2.bf16.msra.mxu0 %v1441
    %1488 = vmatprep.subr.bf16.mxu0 0
    %1489 = vmatpush2.bf16.msra.mxu0 %v1440
    %1490 = vmatprep.subr.bf16.mxu0 0
    %1491 = vmatpush2.bf16.msra.mxu0 %v1439
    %1492 = vmatprep.subr.bf16.mxu0 0
    %1493 = vmatpush2.bf16.msra.mxu0 %v1438
    %1494 = vmatprep.mubr.bf16.mxu0 %v1324
    %1495 = vmatmul.mubr.bf16.gmra.mxu0 %v1323
    %v1496 = vpop.f32.mrf.mxu0
    %v1497 = vadd.f32 %v1364, %v1496
    %v1498 = vpop.f32.mrf.mxu0
    %v1499 = vpop.f32.mrf.mxu0
    %v1500 = vadd.f32 %v1364, %v1499
    %v1501 = vpop.f32.mrf.mxu0
    %1502 = vmatprep.mubr.bf16.mxu0 %v1326
    %1503 = vmatmul.mubr.bf16.gmra.mxu0 %v1325
    %v1504 = vpop.f32.mrf.mxu0
    %v1505 = vadd.f32 %v1364, %v1504
    %v1506 = vpop.f32.mrf.mxu0
    %v1507 = vpop.f32.mrf.mxu0
    %v1508 = vadd.f32 %v1364, %v1507
    %v1509 = vpop.f32.mrf.mxu0
    %1510 = vdwg.mxu0
    %v1511 = vmax.f32 %v1497, 0.0
    %v1512 = vmax.f32 %v1500, 0.0
    %v1513 = vmax.f32 %v1505, 0.0
    %v1514 = vmax.f32 %v1508, 0.0
    %v1515 = vpack.c.bf16 %v1512, %v1511
    %v1516 = vpack.c.bf16 %v1514, %v1513
    %v1517 = vld [vmem:[%s7] sm:$0xf]
    %v1518 = vld [vmem:[%s7 + $0x4] sm:$0xf]
    %v1519 = vld [vmem:[%s7 + $0x8] sm:$0xf]
    %v1520 = vld [vmem:[%s7 + $0xc] sm:$0xf]
    %v1521 = vld [vmem:[%s7 + $0x10] sm:$0xf]
    %v1522 = vld [vmem:[%s7 + $0x14] sm:$0xf]
    %v1523 = vld [vmem:[%s7 + $0x18] sm:$0xf]
    %v1524 = vld [vmem:[%s7 + $0x1c] sm:$0xf]
    %v1525 = vld [vmem:[%s7 + $0x20] sm:$0xf]
    %v1526 = vld [vmem:[%s7 + $0x24] sm:$0xf]
    %v1527 = vld [vmem:[%s7 + $0x28] sm:$0xf]
    %v1528 = vld [vmem:[%s7 + $0x2c] sm:$0xf]
    %v1529 = vld [vmem:[%s7 + $0x30] sm:$0xf]
    %v1530 = vld [vmem:[%s7 + $0x34] sm:$0xf]
    %v1531 = vld [vmem:[%s7 + $0x38] sm:$0xf]
    %v1532 = vld [vmem:[%s7 + $0x3c] sm:$0xf]
    %v1533 = vld [vmem:[%s8] sm:$0x1]
    %v1535 = vlaneseq
    %v1536 = vshrl.u32 %v1535, 7
    %v1537 = vsub.s32 0, %v1536
    %v1538 = vrot.slane %v1533, %v1537
    %v1556 = vunpack.c.l.b16 %v1517
    %v1557 = vunpack.c.l.b16 %v1518
    %v1558 = vunpack.c.l.b16 %v1519
    %v1559 = vunpack.c.l.b16 %v1520
    %v1560 = vunpack.c.l.b16 %v1521
    %v1561 = vunpack.c.l.b16 %v1522
    %v1562 = vunpack.c.l.b16 %v1523
    %v1563 = vunpack.c.l.b16 %v1524
    %v1564 = vunpack.c.l.b16 %v1525
    %v1565 = vunpack.c.l.b16 %v1526
    %v1566 = vunpack.c.l.b16 %v1527
    %v1567 = vunpack.c.l.b16 %v1528
    %v1568 = vunpack.c.l.b16 %v1529
    %v1569 = vunpack.c.l.b16 %v1530
    %v1570 = vunpack.c.l.b16 %v1531
    %v1571 = vunpack.c.l.b16 %v1532
    %v1572 = vpack.c.b16 %v1557, %v1556
    %v1573 = vpack.c.b16 %v1559, %v1558
    %v1574 = vpack.c.b16 %v1561, %v1560
    %v1575 = vpack.c.b16 %v1563, %v1562
    %v1576 = vpack.c.b16 %v1565, %v1564
    %v1577 = vpack.c.b16 %v1567, %v1566
    %v1578 = vpack.c.b16 %v1569, %v1568
    %v1579 = vpack.c.b16 %v1571, %v1570
    %1588 = vmatprep.subr.bf16.mxu0 0
    %1589 = vmatpush1.bf16.msra.mxu0 %v1579
    %1590 = vmatprep.subr.bf16.mxu0 0
    %1591 = vmatpush1.bf16.msra.mxu0 %v1578
    %1592 = vmatprep.subr.bf16.mxu0 0
    %1593 = vmatpush1.bf16.msra.mxu0 %v1577
    %1594 = vmatprep.subr.bf16.mxu0 0
    %1595 = vmatpush1.bf16.msra.mxu0 %v1576
    %1596 = vmatprep.subr.bf16.mxu0 0
    %1597 = vmatpush1.bf16.msra.mxu0 %v1575
    %1598 = vmatprep.subr.bf16.mxu0 0
    %1599 = vmatpush1.bf16.msra.mxu0 %v1574
    %1600 = vmatprep.subr.bf16.mxu0 0
    %1601 = vmatpush1.bf16.msra.mxu0 %v1573
    %1602 = vmatprep.subr.bf16.mxu0 0
    %1603 = vmatpush1.bf16.msra.mxu0 %v1572
    %1604 = vmatprep.subr.bf16.mxu0 0
    %1605 = vmatpush2.bf16.msra.mxu0 0
    %1606 = vmatprep.subr.bf16.mxu0 0
    %1607 = vmatpush2.bf16.msra.mxu0 0
    %1608 = vmatprep.subr.bf16.mxu0 0
    %1609 = vmatpush2.bf16.msra.mxu0 0
    %1610 = vmatprep.subr.bf16.mxu0 0
    %1611 = vmatpush2.bf16.msra.mxu0 0
    %1612 = vmatprep.subr.bf16.mxu0 0
    %1613 = vmatpush2.bf16.msra.mxu0 0
    %1614 = vmatprep.subr.bf16.mxu0 0
    %1615 = vmatpush2.bf16.msra.mxu0 0
    %1616 = vmatprep.subr.bf16.mxu0 0
    %1617 = vmatpush2.bf16.msra.mxu0 0
    %1618 = vmatprep.subr.bf16.mxu0 0
    %1619 = vmatpush2.bf16.msra.mxu0 0
    %1620 = vmatprep.mubr.bf16.mxu0 0
    %1621 = vmatmul.mubr.bf16.gmra.mxu0 %v1515
    %v1622 = vpop.f32.mrf.mxu0
    %v1623 = vadd.f32 %v1538, %v1622
    %v1624 = vpop.f32.mrf.mxu0
    %v1625 = vpop.f32.mrf.mxu0
    %v1626 = vadd.f32 %v1538, %v1625
    %v1627 = vpop.f32.mrf.mxu0
    %1628 = vmatprep.mubr.bf16.mxu0 0
    %1629 = vmatmul.mubr.bf16.gmra.mxu0 %v1516
    %v1630 = vpop.f32.mrf.mxu0
    %v1631 = vadd.f32 %v1538, %v1630
    %v1632 = vpop.f32.mrf.mxu0
    %v1633 = vpop.f32.mrf.mxu0
    %v1634 = vadd.f32 %v1538, %v1633
    %v1635 = vpop.f32.mrf.mxu0
    %1636 = vdwg.mxu0
    %v1637 = vmax.f32 %v1623, 0.0
    %v1638 = vmax.f32 %v1626, 0.0
    %v1639 = vmax.f32 %v1631, 0.0
    %v1640 = vmax.f32 %v1634, 0.0
    %v1641 = vpack.c.bf16 %v1638, %v1637
    %v1642 = vpack.c.bf16 %v1640, %v1639
    %v1643 = vld [vmem:[%s9] sm:$0xf]
    %v1644 = vld [vmem:[%s9 + $0x4] sm:$0xf]
    %v1645 = vld [vmem:[%s9 + $0x8] sm:$0xf]
    %v1646 = vld [vmem:[%s9 + $0xc] sm:$0xf]
    %v1647 = vld [vmem:[%s9 + $0x10] sm:$0xf]
    %v1648 = vld [vmem:[%s9 + $0x14] sm:$0xf]
    %v1649 = vld [vmem:[%s9 + $0x18] sm:$0xf]
    %v1650 = vld [vmem:[%s9 + $0x1c] sm:$0xf]
    %v1651 = vld [vmem:[%s10] sm:$0x1]
    %v1653 = vlaneseq
    %v1654 = vshrl.u32 %v1653, 7
    %v1655 = vsub.s32 0, %v1654
    %v1656 = vrot.slane %v1651, %v1655
    %v1666 = vunpack.c.l.b16 %v1643
    %v1667 = vunpack.c.l.b16 %v1644
    %v1668 = vunpack.c.l.b16 %v1645
    %v1669 = vunpack.c.l.b16 %v1646
    %v1670 = vunpack.c.l.b16 %v1647
    %v1671 = vunpack.c.l.b16 %v1648
    %v1672 = vunpack.c.l.b16 %v1649
    %v1673 = vunpack.c.l.b16 %v1650
    %v1674 = vpack.c.b16 %v1667, %v1666
    %v1675 = vpack.c.b16 %v1669, %v1668
    %v1676 = vpack.c.b16 %v1671, %v1670
    %v1677 = vpack.c.b16 %v1673, %v1672
    %vm1682 = vcmask 523264
    %v1684 = vsel %vm1682, %v1641, 0
    %v1687 = vsel %vm1682, %v1642, 0
    %1689 = vmatprep.subr.bf16.mxu0 0
    %1690 = vmatpush1.bf16.msra.mxu0 0
    %1691 = vmatprep.subr.bf16.mxu0 0
    %1692 = vmatpush1.bf16.msra.mxu0 0
    %1693 = vmatprep.subr.bf16.mxu0 0
    %1694 = vmatpush1.bf16.msra.mxu0 0
    %1695 = vmatprep.subr.bf16.mxu0 0
    %1696 = vmatpush1.bf16.msra.mxu0 0
    %1697 = vmatprep.subr.bf16.mxu0 0
    %1698 = vmatpush1.bf16.msra.mxu0 %v1677
    %1699 = vmatprep.subr.bf16.mxu0 0
    %1700 = vmatpush1.bf16.msra.mxu0 %v1676
    %1701 = vmatprep.subr.bf16.mxu0 0
    %1702 = vmatpush1.bf16.msra.mxu0 %v1675
    %1703 = vmatprep.subr.bf16.mxu0 0
    %1704 = vmatpush1.bf16.msra.mxu0 %v1674
    %1705 = vmatprep.subr.bf16.mxu0 0
    %1706 = vmatpush2.bf16.msra.mxu0 0
    %1707 = vmatprep.subr.bf16.mxu0 0
    %1708 = vmatpush2.bf16.msra.mxu0 0
    %1709 = vmatprep.subr.bf16.mxu0 0
    %1710 = vmatpush2.bf16.msra.mxu0 0
    %1711 = vmatprep.subr.bf16.mxu0 0
    %1712 = vmatpush2.bf16.msra.mxu0 0
    %1713 = vmatprep.subr.bf16.mxu0 0
    %1714 = vmatpush2.bf16.msra.mxu0 0
    %1715 = vmatprep.subr.bf16.mxu0 0
    %1716 = vmatpush2.bf16.msra.mxu0 0
    %1717 = vmatprep.subr.bf16.mxu0 0
    %1718 = vmatpush2.bf16.msra.mxu0 0
    %1719 = vmatprep.subr.bf16.mxu0 0
    %1720 = vmatpush2.bf16.msra.mxu0 0
    %1721 = vmatprep.mubr.bf16.mxu0 0
    %1722 = vmatmul.mubr.bf16.gmra.mxu0 %v1684
    %v1723 = vpop.f32.mrf.mxu0
    %v1724 = vadd.f32 %v1656, %v1723
    %v1725 = vpop.f32.mrf.mxu0
    %v1726 = vpop.f32.mrf.mxu0
    %v1727 = vadd.f32 %v1656, %v1726
    %v1728 = vpop.f32.mrf.mxu0
    %1729 = vmatprep.mubr.bf16.mxu0 0
    %1730 = vmatmul.mubr.bf16.gmra.mxu0 %v1687
    %v1731 = vpop.f32.mrf.mxu0
    %v1732 = vadd.f32 %v1656, %v1731
    %v1733 = vpop.f32.mrf.mxu0
    %v1734 = vpop.f32.mrf.mxu0
    %v1735 = vadd.f32 %v1656, %v1734
    %v1736 = vpop.f32.mrf.mxu0
    %1737 = vdwg.mxu0
    %1738 = vst [vmem:[#allocation7] sm:$0xff] %v1724
    %1739 = vst [vmem:[#allocation7 + $0x8] sm:$0xff] %v1727
    %1740 = vst [vmem:[#allocation7 + $0x10] sm:$0xff] %v1732
    %1741 = vst [vmem:[#allocation7 + $0x18] sm:$0xff] %v1735
    // Predicated region
    $region54: #{tpu_custom_call.1} parent=1 // pred_check
      _
    $region55: #{tpu_custom_call.1} parent=1 // pred_check_branch
      %1743 = sbr.rel (0) target = $region57
    $region56: #{tpu_custom_call.1} parent=1 // pred_region
      %s1745 = ssub.s32 512, 128
      %1746 = vsyncadd [#allocation4], %s1745
      %s1747 = sshll.u32 [#allocation7], 4
      %s1748 = int_to_ptr.vmem [resolvable:$true] %s1747
      %1753 = dma.vmem_to_hbm [thread:$0]  %s1748, 128, %s11, [#allocation4], 128, 128, 8
    $region57: #{tpu_custom_call.1} parent=1 // pred_fallthru
      _
    // Predicated region
    $region58: #{tpu_custom_call.1} parent=1 // pred_check
      _
    $region59: #{tpu_custom_call.1} parent=1 // pred_check_branch
      %1755 = sbr.rel (0) target = $region61
    $region60: #{tpu_custom_call.1} parent=1 // pred_region
      %1756 = dma.done [#allocation4], 512
    $region61: #{tpu_custom_call.1} parent=1 // pred_fallthru
      _
    %1757 = vsyncpa [#allocation3], 1
    %1758 = vsyncpa [#allocation6], 1
    %1759 = vsyncpa [#allocation4], 1

</llo_original>
